<compile_context>
chip_gen: v7x
topology: tpu7x:2x2x1
jax: 0.10.0
libtpu: 0.0.40
codegen_flags: <defaults>
</compile_context>

<pallas_src>
import jax
import jax.numpy as jnp
from jax.experimental import pallas as pl
from jax.experimental.pallas import tpu as pltpu

BN_EPS = 1e-5
KSIZE = 4


# ----------------------------- Pallas kernels ------------------------------ #

def _gemm_stats_kernel(x_ref, w_ref, o_ref, st_ref, acc_ref):
    """Tiled GEMM (bf16 x bf16 -> f32) on a (P, M, N, K) grid that also emits
    per-tile column sums / sums-of-squares (rows 0 / 1 of an (8, tn) stats
    block) for BatchNorm."""
    @pl.when(pl.program_id(3) == 0)
    def _():
        acc_ref[...] = jnp.zeros_like(acc_ref)

    acc_ref[...] += jnp.dot(x_ref[...], w_ref[...],
                            preferred_element_type=jnp.float32)

    @pl.when(pl.program_id(3) == pl.num_programs(3) - 1)
    def _():
        acc = acc_ref[...]
        o_ref[...] = acc
        s1 = jnp.sum(acc, axis=0, keepdims=True)
        s2 = jnp.sum(acc * acc, axis=0, keepdims=True)
        pad = jnp.zeros((6, s1.shape[1]), jnp.float32)
        st_ref[...] = jnp.concatenate([s1, s2, pad], axis=0)   # full-block store


def _gemm_tanh_kernel(x_ref, w_ref, o_ref, acc_ref):
    """Tiled GEMM with tanh fused into the K-loop epilogue (final layer)."""
    @pl.when(pl.program_id(3) == 0)
    def _():
        acc_ref[...] = jnp.zeros_like(acc_ref)

    acc_ref[...] += jnp.dot(x_ref[...], w_ref[...],
                            preferred_element_type=jnp.float32)

    @pl.when(pl.program_id(3) == pl.num_programs(3) - 1)
    def _():
        o_ref[...] = jnp.tanh(acc_ref[...])


def _bn_relu_kernel(y_ref, sc_ref, sh_ref, o_ref):
    """Lane-dense per-column affine (folded BatchNorm) + ReLU; f32 math, bf16 out."""
    y = y_ref[...] * sc_ref[...] + sh_ref[...]
    o_ref[...] = jnp.maximum(y, 0.0).astype(o_ref.dtype)


# ------------------------------ tiling helpers ------------------------------ #

def _round_up(x, m):
    return -(-x // m) * m


def _largest_tile(dim, candidates):
    for c in candidates:
        if dim % c == 0:
            return c
    return candidates[-1]


def _gemm_tiles(m, k, n):
    mp = _round_up(m, 16)
    kp = _round_up(k, 128)
    np_ = _round_up(n, 128)
    tm = _largest_tile(mp, (256, 128, 64, 32, 16))
    tk = _largest_tile(kp, (512, 256, 128))
    tn = _largest_tile(np_, (512, 256, 128))
    return (mp, kp, np_), (tm, tk, tn)


def _gemm_compiler_params(ngrid):
    return pltpu.CompilerParams(
        dimension_semantics=("parallel",) * (ngrid - 1) + ("arbitrary",),
        vmem_limit_bytes=64 * 1024 * 1024)


# ----------------------------- pallas wrappers ------------------------------ #

def gemm_stats(x3d, w3d):
    """Batched y[p] = x[p] @ w[p] (bf16 in, f32 accumulate) plus per-phase
    per-column sum / sum-of-squares over the (true) M rows.

    x3d: (P, M, K)   w3d: (P, K, N)
    Returns padded y (P, Mp, Np), sums (P, Np), sumsq (P, Np), (tm, tn)."""
    p, m, k = x3d.shape
    _, _, ncols = w3d.shape
    (mp, kp, np_), (tm, tk, tn) = _gemm_tiles(m, k, ncols)
    xp = jnp.pad(x3d.astype(jnp.bfloat16), ((0, 0), (0, mp - m), (0, kp - k)))
    wp = jnp.pad(w3d.astype(jnp.bfloat16), ((0, 0), (0, kp - k), (0, np_ - ncols)))
    gm, gn, gk = mp // tm, np_ // tn, kp // tk

    y, st = pl.pallas_call(
        _gemm_stats_kernel,
        out_shape=(jax.ShapeDtypeStruct((p, mp, np_), jnp.float32),
                   jax.ShapeDtypeStruct((p, gm * 8, np_), jnp.float32)),
        grid_spec=pltpu.PrefetchScalarGridSpec(
            num_scalar_prefetch=0,
            grid=(p, gm, gn, gk),
            in_specs=[pl.BlockSpec((None, tm, tk), lambda b, i, j, kk: (b, i, kk)),
                      pl.BlockSpec((None, tk, tn), lambda b, i, j, kk: (b, kk, j))],
            out_specs=[pl.BlockSpec((None, tm, tn), lambda b, i, j, kk: (b, i, j)),
                       pl.BlockSpec((None, 8, tn), lambda b, i, j, kk: (b, i, j))],
            scratch_shapes=[pltpu.VMEM((tm, tn), jnp.float32)]),
        compiler_params=_gemm_compiler_params(4),
    )(xp, wp)

    st = st.reshape(p, gm, 8, np_)
    col_sum = jnp.sum(st[:, :, 0, :], axis=1)       # (P, Np)
    col_sumsq = jnp.sum(st[:, :, 1, :], axis=1)     # (P, Np)
    return y, col_sum, col_sumsq, (tm, tn)


def gemm_tanh(x3d, w3d):
    """Batched tanh(x[p] @ w[p]) with bf16 inputs / f32 accumulation."""
    p, m, k = x3d.shape
    _, _, ncols = w3d.shape
    (mp, kp, np_), (tm, tk, tn) = _gemm_tiles(m, k, ncols)
    xp = jnp.pad(x3d.astype(jnp.bfloat16), ((0, 0), (0, mp - m), (0, kp - k)))
    wp = jnp.pad(w3d.astype(jnp.bfloat16), ((0, 0), (0, kp - k), (0, np_ - ncols)))
    gm, gn, gk = mp // tm, np_ // tn, kp // tk

    return pl.pallas_call(
        _gemm_tanh_kernel,
        out_shape=jax.ShapeDtypeStruct((p, mp, np_), jnp.float32),
        grid_spec=pltpu.PrefetchScalarGridSpec(
            num_scalar_prefetch=0,
            grid=(p, gm, gn, gk),
            in_specs=[pl.BlockSpec((None, tm, tk), lambda b, i, j, kk: (b, i, kk)),
                      pl.BlockSpec((None, tk, tn), lambda b, i, j, kk: (b, kk, j))],
            out_specs=pl.BlockSpec((None, tm, tn), lambda b, i, j, kk: (b, i, j)),
            scratch_shapes=[pltpu.VMEM((tm, tn), jnp.float32)]),
        compiler_params=_gemm_compiler_params(4),
    )(xp, wp)


def bn_relu_apply(y_pad, scale_cols, shift_cols, tiles):
    """o[p] = relu(y[p] * scale + shift) per column; bf16 output for the next layer.
    y_pad: (P, Mp, Np); scale_cols / shift_cols: (1, Np)."""
    tm, tn = tiles
    p, mp, np_ = y_pad.shape
    gm, gn = mp // tm, np_ // tn
    return pl.pallas_call(
        _bn_relu_kernel,
        out_shape=jax.ShapeDtypeStruct((p, mp, np_), jnp.bfloat16),
        grid_spec=pltpu.PrefetchScalarGridSpec(
            num_scalar_prefetch=0,
            grid=(p, gm, gn),
            in_specs=[pl.BlockSpec((None, tm, tn), lambda b, i, j: (b, i, j)),
                      pl.BlockSpec((1, tn), lambda b, i, j: (0, j)),
                      pl.BlockSpec((1, tn), lambda b, i, j: (0, j))],
            out_specs=pl.BlockSpec((None, tm, tn), lambda b, i, j: (b, i, j))),
        compiler_params=pltpu.CompilerParams(
            dimension_semantics=("parallel", "parallel", "parallel")),
    )(y_pad, scale_cols.astype(jnp.float32), shift_cols.astype(jnp.float32))


# ------------------------------- layer glue --------------------------------- #

def _bn_scale_shift(col_sum, col_sumsq, count, gamma, beta):
    mean = col_sum / count
    var = jnp.maximum(col_sumsq / count - mean * mean, 0.0)
    inv = jax.lax.rsqrt(var + BN_EPS)
    scale = gamma * inv
    shift = beta - mean * scale
    return scale, shift


def _latent_layer(x2d, layer):
    """ConvTranspose2d(k, Cout, 4, 1, 0) on the 1x1 latent + BatchNorm + ReLU."""
    n = x2d.shape[0]
    gamma, beta = layer["gamma"], layer["beta"]
    cout = gamma.shape[0]
    y_pad, s, ss, tiles = gemm_stats(x2d[None], layer["w_gemm"][None])
    cols = KSIZE * KSIZE * cout                                  # (ky, kx, co) order
    s_ch = jnp.sum(s[0, :cols].reshape(KSIZE * KSIZE, cout), axis=0)
    ss_ch = jnp.sum(ss[0, :cols].reshape(KSIZE * KSIZE, cout), axis=0)
    scale, shift = _bn_scale_shift(s_ch, ss_ch, float(KSIZE * KSIZE * n), gamma, beta)
    np_ = y_pad.shape[-1]
    scale_cols = jnp.pad(jnp.tile(scale, KSIZE * KSIZE), (0, np_ - cols),
                         constant_values=1.0)[None, :]
    shift_cols = jnp.pad(jnp.tile(shift, KSIZE * KSIZE), (0, np_ - cols))[None, :]
    o = bn_relu_apply(y_pad, scale_cols, shift_cols, tiles)
    return o[0, :n, :cols].reshape(n, KSIZE, KSIZE, cout)        # NHWC, bf16


def _phase_patch_mats(x_nhwc):
    """2x2-tap patch matrices for the 4 sub-pixel phases of a stride-2 deconv.
    Returns (4, n*h*w, 4*c); phase p = 2*py + px, columns ordered (dy, dx, ci)."""
    n, h, w, c = x_nhwc.shape
    xp = jnp.pad(x_nhwc, ((0, 0), (1, 1), (1, 1), (0, 0)))
    mats = []
    for py in range(2):
        for px in range(2):
            taps = [xp[:, py + dy:py + dy + h, px + dx:px + dx + w, :]
                    for dy in range(2) for dx in range(2)]
            mats.append(jnp.concatenate(taps, axis=-1).reshape(n * h * w, 4 * c))
    return jnp.stack(mats, axis=0)


def _interleave_phases(y, n, h, w, c):
    """y: (4, n, h, w, c) with p = 2*py + px -> out[:, 2i+py, 2j+px, :] = y[p,:,i,j,:]"""
    y = y.reshape(2, 2, n, h, w, c)
    y = jnp.transpose(y, (2, 3, 0, 4, 1, 5))            # (n, h, py, w, px, c)
    return y.reshape(n, 2 * h, 2 * w, c)


def _upsample_bn_relu_layer(x_nhwc, layer):
    """ConvTranspose2d(Cin, Cout, 4, 2, 1) + BatchNorm + ReLU via batched phase GEMMs."""
    n, h, w, _ = x_nhwc.shape
    gamma, beta = layer["gamma"], layer["beta"]
    cout = gamma.shape[0]
    mats = _phase_patch_mats(x_nhwc)                      # (4, n*h*w, 4*Cin)
    y_pad, s, ss, tiles = gemm_stats(mats, layer["w_phase"])
    s_tot = jnp.sum(s, axis=0)[:cout]
    ss_tot = jnp.sum(ss, axis=0)[:cout]
    count = float(4 * n * h * w)                          # all output pixels x batch
    scale, shift = _bn_scale_shift(s_tot, ss_tot, count, gamma, beta)
    np_ = y_pad.shape[-1]
    scale_cols = jnp.pad(scale, (0, np_ - cout), constant_values=1.0)[None, :]
    shift_cols = jnp.pad(shift, (0, np_ - cout))[None, :]
    o = bn_relu_apply(y_pad, scale_cols, shift_cols, tiles)
    m = n * h * w
    y = o[:, :m, :cout].reshape(4, n, h, w, cout)
    return _interleave_phases(y, n, h, w, cout)           # NHWC, bf16


def _upsample_tanh_layer(x_nhwc, layer):
    """Final ConvTranspose2d(Cin, nc, 4, 2, 1) + Tanh via batched phase GEMMs."""
    n, h, w, _ = x_nhwc.shape
    cout = layer["w_phase"].shape[-1]
    mats = _phase_patch_mats(x_nhwc)
    y_pad = gemm_tanh(mats, layer["w_phase"])
    m = n * h * w
    y = y_pad[:, :m, :cout].reshape(4, n, h, w, cout)
    return _interleave_phases(y, n, h, w, cout)           # NHWC, f32


# ------------------------------- parameters --------------------------------- #

def _phase_weights(w):
    """(Cin, Cout, 4, 4) ConvTranspose2d weight -> (4, 4*Cin, Cout) phase GEMM
    weights; phase p = 2*py + px, rows ordered (dy, dx, ci)."""
    phases = []
    for py in range(2):
        for px in range(2):
            taps = []
            for dy in range(2):
                for dx in range(2):
                    ky, kx = 3 - py - 2 * dy, 3 - px - 2 * dx
                    taps.append(w[:, :, ky, kx])          # (Cin, Cout)
            phases.append(jnp.concatenate(taps, axis=0))  # (4*Cin, Cout)
    return jnp.stack(phases, axis=0)


def make_decoder_params(key, isize, nc, k=100, ngf=64):
    assert isize % 16 == 0, "isize has to be a multiple of 16"
    cngf, tisize = ngf // 2, 4
    while tisize != isize:
        cngf *= 2
        tisize *= 2
    cfgs = [(k, cngf, 1, True)]                            # (Cin, Cout, stride, bn)
    csize = 4
    while csize < isize // 2:
        cfgs.append((cngf, cngf // 2, 2, True))
        cngf //= 2
        csize *= 2
    cfgs.append((cngf, nc, 2, False))

    params = []
    for (ci, co, stride, bn) in cfgs:
        key, kw, kg, kb = jax.random.split(key, 4)
        w = 0.02 * jax.random.normal(kw, (ci, co, KSIZE, KSIZE), jnp.float32)
        layer = {"w": w}                                   # kept for the reference
        if stride == 1:
            # (Cin, Cout, 4, 4) -> (Cin, 16*Cout), columns ordered (ky, kx, co)
            layer["w_gemm"] = jnp.transpose(w, (0, 2, 3, 1)).reshape(
                ci, KSIZE * KSIZE * co)
        else:
            layer["w_phase"] = _phase_weights(w)
        if bn:
            layer["gamma"] = 1.0 + 0.1 * jax.random.normal(kg, (co,), jnp.float32)
            layer["beta"] = 0.1 * jax.random.normal(kb, (co,), jnp.float32)
        params.append(layer)
    return params


# --------------------------------- forward ---------------------------------- #

def decoder_forward(params, x_nchw):
    # TODO(synk): layer 0 assumes the canonical DCGAN 1x1 latent input; a general
    # stride-1 ConvTranspose input would need a full im2col path.
    n, cin, hin, win = x_nchw.shape
    assert hin == 1 and win == 1, "Decoder expects a (N, k, 1, 1) latent"
    x = _latent_layer(x_nchw.reshape(n, cin).astype(jnp.float32), params[0])
    for layer in params[1:]:
        if "gamma" in layer:
            x = _upsample_bn_relu_layer(x, layer)
        else:
            x = _upsample_tanh_layer(x, layer)
    return jnp.transpose(x, (0, 3, 1, 2))                  # NHWC -> NCHW, f32


def decoder_reference(params, x_nchw):
    """Pure-JAX reference (lax conv) with matching bf16-in / f32-accumulate
    precision and bf16 inter-layer activations."""
    x = jnp.transpose(x_nchw, (0, 2, 3, 1)).astype(jnp.float32)
    for layer in params:
        stride, pad = (1, 0) if "w_gemm" in layer else (2, 1)
        w = jnp.transpose(jnp.flip(layer["w"], axis=(2, 3)), (2, 3, 0, 1))  # HWIO
        y = jax.lax.conv_general_dilated(
            x.astype(jnp.bfloat16), w.astype(jnp.bfloat16),
            window_strides=(1, 1),
            padding=[(KSIZE - 1 - pad, KSIZE - 1 - pad)] * 2,
            lhs_dilation=(stride, stride),
            dimension_numbers=("NHWC", "HWIO", "NHWC"),
            preferred_element_type=jnp.float32)
        if "gamma" in layer:
            mean = jnp.mean(y, axis=(0, 1, 2), keepdims=True)
            var = jnp.mean(jnp.square(y - mean), axis=(0, 1, 2), keepdims=True)
            y = layer["gamma"] * (y - mean) * jax.lax.rsqrt(var + BN_EPS) + layer["beta"]
            y = jnp.maximum(y, 0.0).astype(jnp.bfloat16).astype(jnp.float32)
        else:
            y = jnp.tanh(y)
        x = y
    return jnp.transpose(x, (0, 3, 1, 2))


if __name__ == "__main__":
    fwd = jax.jit(decoder_forward)
    # (isize, nc, k, ngf, batch): the first is a small toy config; the second
    # (still small) exercises multi-tile M/N/K grids and the cross-tile
    # BatchNorm partial-sum reduction.
    configs = [
        (16, 4, 8, 8, 2),
        (32, 3, 36, 64, 8),
    ]
    for (isize, nc, k, ngf, batch) in configs:
        key = jax.random.PRNGKey(0)
        kp, kx = jax.random.split(key)
        params = make_decoder_params(kp, isize, nc, k=k, ngf=ngf)
        x = jax.random.normal(kx, (batch, k, 1, 1), jnp.float32)  # DCGAN latent

        out = jax.block_until_ready(fwd(params, x))
        assert out.shape == (batch, nc, isize, isize), out.shape
        assert bool(jnp.all(jnp.isfinite(out)))

        ref = decoder_reference(params, x)
        max_diff = float(jnp.max(jnp.abs(out - ref)))
        assert max_diff < 4e-2, f"mismatch vs reference (isize={isize}): {max_diff}"

    print("KERNEL_OK")
</pallas_src>

<mosaic_0001>
module attributes {stable_mosaic.version = 11 : i64} {
  func.func @_gemm_stats_kernel(%arg0: i32, %arg1: i32, %arg2: i32, %arg3: i32, %arg4: memref<1x16x128xbf16, #tpu.memory_space<vmem>>, %arg5: memref<1x128x256xbf16, #tpu.memory_space<vmem>>, %arg6: memref<1x16x256xf32, #tpu.memory_space<vmem>>, %arg7: memref<1x8x256xf32, #tpu.memory_space<vmem>>, %arg8: memref<16x256xf32, #tpu.memory_space<vmem>>) attributes {dimension_semantics = [#tpu.dimension_semantics<parallel>, #tpu.dimension_semantics<parallel>, #tpu.dimension_semantics<parallel>, #tpu.dimension_semantics<arbitrary>], iteration_bounds = array<i64: 1, 1, 1, 1>, scalar_prefetch = 0 : i64, scratch_operands = 1 : i64, tpu.core_type = #tpu.core_type<tc>, window_params = [{transform_indices = @transform_0, window_bounds = array<i64: 1, 16, 128>}, {transform_indices = @transform_1, window_bounds = array<i64: 1, 128, 256>}, {transform_indices = @transform_2, window_bounds = array<i64: 1, 16, 256>}, {transform_indices = @transform_3, window_bounds = array<i64: 1, 8, 256>}]} {
    %c0_i32 = arith.constant 0 : i32
    %0 = arith.cmpi eq, %arg3, %c0_i32 : i32
    %1 = arith.extui %0 : i1 to i32
    %c0_i32_0 = arith.constant 0 : i32
    %2 = arith.cmpi ne, %1, %c0_i32_0 : i32
    scf.if %2 {
      %cst_12 = arith.constant 0.000000e+00 : f32
      %14 = vector.broadcast %cst_12 : f32 to vector<16x256xf32>
      %c0_13 = arith.constant 0 : index
      %c0_14 = arith.constant 0 : index
      %15 = vector.load %arg8[%c0_13, %c0_14] : memref<16x256xf32, #tpu.memory_space<vmem>>, vector<16x256xf32>
      tpu.vector_store %arg8[%c0_13, %c0_14], %14 {strides = array<i32>} : memref<16x256xf32, #tpu.memory_space<vmem>>, vector<16x256xf32>,
    } else {
    }
    %c0 = arith.constant 0 : index
    %c0_1 = arith.constant 0 : index
    %3 = vector.load %arg8[%c0, %c0_1] : memref<16x256xf32, #tpu.memory_space<vmem>>, vector<16x256xf32>
    %c0_2 = arith.constant 0 : index
    %c0_3 = arith.constant 0 : index
    %c0_4 = arith.constant 0 : index
    %4 = vector.load %arg4[%c0_2, %c0_3, %c0_4] : memref<1x16x128xbf16, #tpu.memory_space<vmem>>, vector<1x16x128xbf16>
    %5 = vector.shape_cast %4 : vector<1x16x128xbf16> to vector<16x128xbf16>
    %c0_5 = arith.constant 0 : index
    %c0_6 = arith.constant 0 : index
    %c0_7 = arith.constant 0 : index
    %6 = vector.load %arg5[%c0_5, %c0_6, %c0_7] : memref<1x128x256xbf16, #tpu.memory_space<vmem>>, vector<1x128x256xbf16>
    %7 = vector.shape_cast %6 : vector<1x128x256xbf16> to vector<128x256xbf16>
    %cst = arith.constant dense<0.000000e+00> : vector<16x256xf32>
    %8 = tpu.matmul %5, %7, %cst {dimension_numbers = #tpu.dot_dimension_numbers<[1], [0], [0], [1], [0, 0, 1, 1], [], []>} : vector<16x128xbf16>, vector<128x256xbf16>, vector<16x256xf32> -> vector<16x256xf32>
    %9 = arith.addf %3, %8 : vector<16x256xf32>
    %c0_8 = arith.constant 0 : index
    %c0_9 = arith.constant 0 : index
    %10 = vector.load %arg8[%c0_8, %c0_9] : memref<16x256xf32, #tpu.memory_space<vmem>>, vector<16x256xf32>
    tpu.vector_store %arg8[%c0_8, %c0_9], %9 {strides = array<i32>} : memref<16x256xf32, #tpu.memory_space<vmem>>, vector<16x256xf32>,
    %c0_i32_10 = arith.constant 0 : i32
    %11 = arith.cmpi eq, %arg3, %c0_i32_10 : i32
    %12 = arith.extui %11 : i1 to i32
    %c0_i32_11 = arith.constant 0 : i32
    %13 = arith.cmpi ne, %12, %c0_i32_11 : i32
    scf.if %13 {
      %c0_12 = arith.constant 0 : index
      %c0_13 = arith.constant 0 : index
      %14 = vector.load %arg8[%c0_12, %c0_13] : memref<16x256xf32, #tpu.memory_space<vmem>>, vector<16x256xf32>
      %c0_14 = arith.constant 0 : index
      %c0_15 = arith.constant 0 : index
      %c0_16 = arith.constant 0 : index
      %15 = vector.load %arg6[%c0_14, %c0_15, %c0_16] : memref<1x16x256xf32, #tpu.memory_space<vmem>>, vector<1x16x256xf32>
      %16 = vector.shape_cast %15 : vector<1x16x256xf32> to vector<16x256xf32>
      %17 = vector.shape_cast %14 : vector<16x256xf32> to vector<1x16x256xf32>
      tpu.vector_store %arg6[%c0_14, %c0_15, %c0_16], %17 {strides = array<i32>} : memref<1x16x256xf32, #tpu.memory_space<vmem>>, vector<1x16x256xf32>,
      %cst_17 = arith.constant dense<0.000000e+00> : vector<256xf32>
      %18 = vector.multi_reduction <add>, %14, %cst_17 [0] : vector<16x256xf32> to vector<256xf32>
      %19 = vector.shape_cast %18 : vector<256xf32> to vector<1x256xf32>
      %20 = arith.mulf %14, %14 : vector<16x256xf32>
      %cst_18 = arith.constant dense<0.000000e+00> : vector<256xf32>
      %21 = vector.multi_reduction <add>, %20, %cst_18 [0] : vector<16x256xf32> to vector<256xf32>
      %22 = vector.shape_cast %21 : vector<256xf32> to vector<1x256xf32>
      %cst_19 = arith.constant 0.000000e+00 : f32
      %23 = vector.broadcast %cst_19 : f32 to vector<6x256xf32>
      %24 = tpu.concatenate %19, %22, %23 in 0 : vector<1x256xf32>, vector<1x256xf32>, vector<6x256xf32> -> vector<8x256xf32>
      %c0_20 = arith.constant 0 : index
      %c0_21 = arith.constant 0 : index
      %c0_22 = arith.constant 0 : index
      %25 = vector.load %arg7[%c0_20, %c0_21, %c0_22] : memref<1x8x256xf32, #tpu.memory_space<vmem>>, vector<1x8x256xf32>
      %26 = vector.shape_cast %25 : vector<1x8x256xf32> to vector<8x256xf32>
      %27 = vector.shape_cast %24 : vector<8x256xf32> to vector<1x8x256xf32>
      tpu.vector_store %arg7[%c0_20, %c0_21, %c0_22], %27 {strides = array<i32>} : memref<1x8x256xf32, #tpu.memory_space<vmem>>, vector<1x8x256xf32>,
    } else {
    }
    return
  }
  func.func @transform_0(%arg0: i32, %arg1: i32, %arg2: i32, %arg3: i32) -> (i32, i32, i32) {
    %c0_i32 = arith.constant 0 : i32
    return %arg0, %arg1, %arg3 : i32, i32, i32
  }
  func.func @transform_1(%arg0: i32, %arg1: i32, %arg2: i32, %arg3: i32) -> (i32, i32, i32) {
    %c0_i32 = arith.constant 0 : i32
    return %arg0, %arg3, %arg2 : i32, i32, i32
  }
  func.func @transform_2(%arg0: i32, %arg1: i32, %arg2: i32, %arg3: i32) -> (i32, i32, i32) {
    %c0_i32 = arith.constant 0 : i32
    return %arg0, %arg1, %arg2 : i32, i32, i32
  }
  func.func @transform_3(%arg0: i32, %arg1: i32, %arg2: i32, %arg3: i32) -> (i32, i32, i32) {
    %c0_i32 = arith.constant 0 : i32
    return %arg0, %arg1, %arg2 : i32, i32, i32
  }
}

module attributes {stable_mosaic.version = 11 : i64} {
  func.func @_bn_relu_kernel(%arg0: i32, %arg1: i32, %arg2: i32, %arg3: memref<1x16x256xf32, #tpu.memory_space<vmem>>, %arg4: memref<1x256xf32, #tpu.memory_space<vmem>>, %arg5: memref<1x256xf32, #tpu.memory_space<vmem>>, %arg6: memref<1x16x256xbf16, #tpu.memory_space<vmem>>) attributes {dimension_semantics = [#tpu.dimension_semantics<parallel>, #tpu.dimension_semantics<parallel>, #tpu.dimension_semantics<parallel>], iteration_bounds = array<i64: 1, 1, 1>, scalar_prefetch = 0 : i64, scratch_operands = 0 : i64, tpu.core_type = #tpu.core_type<tc>, window_params = [{transform_indices = @transform_0, window_bounds = array<i64: 1, 16, 256>}, {transform_indices = @transform_1, window_bounds = array<i64: 1, 256>}, {transform_indices = @transform_2, window_bounds = array<i64: 1, 256>}, {transform_indices = @transform_3, window_bounds = array<i64: 1, 16, 256>}]} {
    %c0 = arith.constant 0 : index
    %c0_0 = arith.constant 0 : index
    %c0_1 = arith.constant 0 : index
    %0 = vector.load %arg3[%c0, %c0_0, %c0_1] : memref<1x16x256xf32, #tpu.memory_space<vmem>>, vector<1x16x256xf32>
    %1 = vector.shape_cast %0 : vector<1x16x256xf32> to vector<16x256xf32>
    %c0_2 = arith.constant 0 : index
    %c0_3 = arith.constant 0 : index
    %2 = vector.load %arg4[%c0_2, %c0_3] : memref<1x256xf32, #tpu.memory_space<vmem>>, vector<1x256xf32>
    %3 = vector.broadcast %2 : vector<1x256xf32> to vector<16x256xf32>
    %4 = arith.mulf %1, %3 : vector<16x256xf32>
    %c0_4 = arith.constant 0 : index
    %c0_5 = arith.constant 0 : index
    %5 = vector.load %arg5[%c0_4, %c0_5] : memref<1x256xf32, #tpu.memory_space<vmem>>, vector<1x256xf32>
    %6 = vector.broadcast %5 : vector<1x256xf32> to vector<16x256xf32>
    %7 = arith.addf %4, %6 : vector<16x256xf32>
    %cst = arith.constant 0.000000e+00 : f32
    %8 = vector.broadcast %cst : f32 to vector<16x256xf32>
    %9 = arith.maximumf %7, %8 : vector<16x256xf32>
    %10 = arith.truncf %9 : vector<16x256xf32> to vector<16x256xbf16>
    %c0_6 = arith.constant 0 : index
    %c0_7 = arith.constant 0 : index
    %c0_8 = arith.constant 0 : index
    %11 = vector.load %arg6[%c0_6, %c0_7, %c0_8] : memref<1x16x256xbf16, #tpu.memory_space<vmem>>, vector<1x16x256xbf16>
    %12 = vector.shape_cast %11 : vector<1x16x256xbf16> to vector<16x256xbf16>
    %13 = vector.shape_cast %10 : vector<16x256xbf16> to vector<1x16x256xbf16>
    tpu.vector_store %arg6[%c0_6, %c0_7, %c0_8], %13 {strides = array<i32>} : memref<1x16x256xbf16, #tpu.memory_space<vmem>>, vector<1x16x256xbf16>,
    return
  }
  func.func @transform_0(%arg0: i32, %arg1: i32, %arg2: i32) -> (i32, i32, i32) {
    %c0_i32 = arith.constant 0 : i32
    return %arg0, %arg1, %arg2 : i32, i32, i32
  }
  func.func @transform_1(%arg0: i32, %arg1: i32, %arg2: i32) -> (i32, i32) {
    %c0_i32 = arith.constant 0 : i32
    %c0_i32_0 = arith.constant 0 : i32
    return %c0_i32, %arg2 : i32, i32
  }
  func.func @transform_2(%arg0: i32, %arg1: i32, %arg2: i32) -> (i32, i32) {
    %c0_i32 = arith.constant 0 : i32
    %c0_i32_0 = arith.constant 0 : i32
    return %c0_i32, %arg2 : i32, i32
  }
  func.func @transform_3(%arg0: i32, %arg1: i32, %arg2: i32) -> (i32, i32, i32) {
    %c0_i32 = arith.constant 0 : i32
    return %arg0, %arg1, %arg2 : i32, i32, i32
  }
}

module attributes {stable_mosaic.version = 11 : i64} {
  func.func @_gemm_stats_kernel(%arg0: i32, %arg1: i32, %arg2: i32, %arg3: i32, %arg4: memref<1x32x128xbf16, #tpu.memory_space<vmem>>, %arg5: memref<1x128x128xbf16, #tpu.memory_space<vmem>>, %arg6: memref<1x32x128xf32, #tpu.memory_space<vmem>>, %arg7: memref<1x8x128xf32, #tpu.memory_space<vmem>>, %arg8: memref<32x128xf32, #tpu.memory_space<vmem>>) attributes {dimension_semantics = [#tpu.dimension_semantics<parallel>, #tpu.dimension_semantics<parallel>, #tpu.dimension_semantics<parallel>, #tpu.dimension_semantics<arbitrary>], iteration_bounds = array<i64: 4, 1, 1, 1>, scalar_prefetch = 0 : i64, scratch_operands = 1 : i64, tpu.core_type = #tpu.core_type<tc>, window_params = [{transform_indices = @transform_0, window_bounds = array<i64: 1, 32, 128>}, {transform_indices = @transform_1, window_bounds = array<i64: 1, 128, 128>}, {transform_indices = @transform_2, window_bounds = array<i64: 1, 32, 128>}, {transform_indices = @transform_3, window_bounds = array<i64: 1, 8, 128>}]} {
    %c0_i32 = arith.constant 0 : i32
    %0 = arith.cmpi eq, %arg3, %c0_i32 : i32
    %1 = arith.extui %0 : i1 to i32
    %c0_i32_0 = arith.constant 0 : i32
    %2 = arith.cmpi ne, %1, %c0_i32_0 : i32
    scf.if %2 {
      %cst_12 = arith.constant 0.000000e+00 : f32
      %14 = vector.broadcast %cst_12 : f32 to vector<32x128xf32>
      %c0_13 = arith.constant 0 : index
      %c0_14 = arith.constant 0 : index
      %15 = vector.load %arg8[%c0_13, %c0_14] : memref<32x128xf32, #tpu.memory_space<vmem>>, vector<32x128xf32>
      tpu.vector_store %arg8[%c0_13, %c0_14], %14 {strides = array<i32>} : memref<32x128xf32, #tpu.memory_space<vmem>>, vector<32x128xf32>,
    } else {
    }
    %c0 = arith.constant 0 : index
    %c0_1 = arith.constant 0 : index
    %3 = vector.load %arg8[%c0, %c0_1] : memref<32x128xf32, #tpu.memory_space<vmem>>, vector<32x128xf32>
    %c0_2 = arith.constant 0 : index
    %c0_3 = arith.constant 0 : index
    %c0_4 = arith.constant 0 : index
    %4 = vector.load %arg4[%c0_2, %c0_3, %c0_4] : memref<1x32x128xbf16, #tpu.memory_space<vmem>>, vector<1x32x128xbf16>
    %5 = vector.shape_cast %4 : vector<1x32x128xbf16> to vector<32x128xbf16>
    %c0_5 = arith.constant 0 : index
    %c0_6 = arith.constant 0 : index
    %c0_7 = arith.constant 0 : index
    %6 = vector.load %arg5[%c0_5, %c0_6, %c0_7] : memref<1x128x128xbf16, #tpu.memory_space<vmem>>, vector<1x128x128xbf16>
    %7 = vector.shape_cast %6 : vector<1x128x128xbf16> to vector<128x128xbf16>
    %cst = arith.constant dense<0.000000e+00> : vector<32x128xf32>
    %8 = tpu.matmul %5, %7, %cst {dimension_numbers = #tpu.dot_dimension_numbers<[1], [0], [0], [1], [0, 0, 1, 1], [], []>} : vector<32x128xbf16>, vector<128x128xbf16>, vector<32x128xf32> -> vector<32x128xf32>
    %9 = arith.addf %3, %8 : vector<32x128xf32>
    %c0_8 = arith.constant 0 : index
    %c0_9 = arith.constant 0 : index
    %10 = vector.load %arg8[%c0_8, %c0_9] : memref<32x128xf32, #tpu.memory_space<vmem>>, vector<32x128xf32>
    tpu.vector_store %arg8[%c0_8, %c0_9], %9 {strides = array<i32>} : memref<32x128xf32, #tpu.memory_space<vmem>>, vector<32x128xf32>,
    %c0_i32_10 = arith.constant 0 : i32
    %11 = arith.cmpi eq, %arg3, %c0_i32_10 : i32
    %12 = arith.extui %11 : i1 to i32
    %c0_i32_11 = arith.constant 0 : i32
    %13 = arith.cmpi ne, %12, %c0_i32_11 : i32
    scf.if %13 {
      %c0_12 = arith.constant 0 : index
      %c0_13 = arith.constant 0 : index
      %14 = vector.load %arg8[%c0_12, %c0_13] : memref<32x128xf32, #tpu.memory_space<vmem>>, vector<32x128xf32>
      %c0_14 = arith.constant 0 : index
      %c0_15 = arith.constant 0 : index
      %c0_16 = arith.constant 0 : index
      %15 = vector.load %arg6[%c0_14, %c0_15, %c0_16] : memref<1x32x128xf32, #tpu.memory_space<vmem>>, vector<1x32x128xf32>
      %16 = vector.shape_cast %15 : vector<1x32x128xf32> to vector<32x128xf32>
      %17 = vector.shape_cast %14 : vector<32x128xf32> to vector<1x32x128xf32>
      tpu.vector_store %arg6[%c0_14, %c0_15, %c0_16], %17 {strides = array<i32>} : memref<1x32x128xf32, #tpu.memory_space<vmem>>, vector<1x32x128xf32>,
      %cst_17 = arith.constant dense<0.000000e+00> : vector<128xf32>
      %18 = vector.multi_reduction <add>, %14, %cst_17 [0] : vector<32x128xf32> to vector<128xf32>
      %19 = vector.shape_cast %18 : vector<128xf32> to vector<1x128xf32>
      %20 = arith.mulf %14, %14 : vector<32x128xf32>
      %cst_18 = arith.constant dense<0.000000e+00> : vector<128xf32>
      %21 = vector.multi_reduction <add>, %20, %cst_18 [0] : vector<32x128xf32> to vector<128xf32>
      %22 = vector.shape_cast %21 : vector<128xf32> to vector<1x128xf32>
      %cst_19 = arith.constant 0.000000e+00 : f32
      %23 = vector.broadcast %cst_19 : f32 to vector<6x128xf32>
      %24 = tpu.concatenate %19, %22, %23 in 0 : vector<1x128xf32>, vector<1x128xf32>, vector<6x128xf32> -> vector<8x128xf32>
      %c0_20 = arith.constant 0 : index
      %c0_21 = arith.constant 0 : index
      %c0_22 = arith.constant 0 : index
      %25 = vector.load %arg7[%c0_20, %c0_21, %c0_22] : memref<1x8x128xf32, #tpu.memory_space<vmem>>, vector<1x8x128xf32>
      %26 = vector.shape_cast %25 : vector<1x8x128xf32> to vector<8x128xf32>
      %27 = vector.shape_cast %24 : vector<8x128xf32> to vector<1x8x128xf32>
      tpu.vector_store %arg7[%c0_20, %c0_21, %c0_22], %27 {strides = array<i32>} : memref<1x8x128xf32, #tpu.memory_space<vmem>>, vector<1x8x128xf32>,
    } else {
    }
    return
  }
  func.func @transform_0(%arg0: i32, %arg1: i32, %arg2: i32, %arg3: i32) -> (i32, i32, i32) {
    %c0_i32 = arith.constant 0 : i32
    return %arg0, %arg1, %arg3 : i32, i32, i32
  }
  func.func @transform_1(%arg0: i32, %arg1: i32, %arg2: i32, %arg3: i32) -> (i32, i32, i32) {
    %c0_i32 = arith.constant 0 : i32
    return %arg0, %arg3, %arg2 : i32, i32, i32
  }
  func.func @transform_2(%arg0: i32, %arg1: i32, %arg2: i32, %arg3: i32) -> (i32, i32, i32) {
    %c0_i32 = arith.constant 0 : i32
    return %arg0, %arg1, %arg2 : i32, i32, i32
  }
  func.func @transform_3(%arg0: i32, %arg1: i32, %arg2: i32, %arg3: i32) -> (i32, i32, i32) {
    %c0_i32 = arith.constant 0 : i32
    return %arg0, %arg1, %arg2 : i32, i32, i32
  }
}

module attributes {stable_mosaic.version = 11 : i64} {
  func.func @_bn_relu_kernel(%arg0: i32, %arg1: i32, %arg2: i32, %arg3: memref<1x32x128xf32, #tpu.memory_space<vmem>>, %arg4: memref<1x128xf32, #tpu.memory_space<vmem>>, %arg5: memref<1x128xf32, #tpu.memory_space<vmem>>, %arg6: memref<1x32x128xbf16, #tpu.memory_space<vmem>>) attributes {dimension_semantics = [#tpu.dimension_semantics<parallel>, #tpu.dimension_semantics<parallel>, #tpu.dimension_semantics<parallel>], iteration_bounds = array<i64: 4, 1, 1>, scalar_prefetch = 0 : i64, scratch_operands = 0 : i64, tpu.core_type = #tpu.core_type<tc>, window_params = [{transform_indices = @transform_0, window_bounds = array<i64: 1, 32, 128>}, {transform_indices = @transform_1, window_bounds = array<i64: 1, 128>}, {transform_indices = @transform_2, window_bounds = array<i64: 1, 128>}, {transform_indices = @transform_3, window_bounds = array<i64: 1, 32, 128>}]} {
    %c0 = arith.constant 0 : index
    %c0_0 = arith.constant 0 : index
    %c0_1 = arith.constant 0 : index
    %0 = vector.load %arg3[%c0, %c0_0, %c0_1] : memref<1x32x128xf32, #tpu.memory_space<vmem>>, vector<1x32x128xf32>
    %1 = vector.shape_cast %0 : vector<1x32x128xf32> to vector<32x128xf32>
    %c0_2 = arith.constant 0 : index
    %c0_3 = arith.constant 0 : index
    %2 = vector.load %arg4[%c0_2, %c0_3] : memref<1x128xf32, #tpu.memory_space<vmem>>, vector<1x128xf32>
    %3 = vector.broadcast %2 : vector<1x128xf32> to vector<32x128xf32>
    %4 = arith.mulf %1, %3 : vector<32x128xf32>
    %c0_4 = arith.constant 0 : index
    %c0_5 = arith.constant 0 : index
    %5 = vector.load %arg5[%c0_4, %c0_5] : memref<1x128xf32, #tpu.memory_space<vmem>>, vector<1x128xf32>
    %6 = vector.broadcast %5 : vector<1x128xf32> to vector<32x128xf32>
    %7 = arith.addf %4, %6 : vector<32x128xf32>
    %cst = arith.constant 0.000000e+00 : f32
    %8 = vector.broadcast %cst : f32 to vector<32x128xf32>
    %9 = arith.maximumf %7, %8 : vector<32x128xf32>
    %10 = arith.truncf %9 : vector<32x128xf32> to vector<32x128xbf16>
    %c0_6 = arith.constant 0 : index
    %c0_7 = arith.constant 0 : index
    %c0_8 = arith.constant 0 : index
    %11 = vector.load %arg6[%c0_6, %c0_7, %c0_8] : memref<1x32x128xbf16, #tpu.memory_space<vmem>>, vector<1x32x128xbf16>
    %12 = vector.shape_cast %11 : vector<1x32x128xbf16> to vector<32x128xbf16>
    %13 = vector.shape_cast %10 : vector<32x128xbf16> to vector<1x32x128xbf16>
    tpu.vector_store %arg6[%c0_6, %c0_7, %c0_8], %13 {strides = array<i32>} : memref<1x32x128xbf16, #tpu.memory_space<vmem>>, vector<1x32x128xbf16>,
    return
  }
  func.func @transform_0(%arg0: i32, %arg1: i32, %arg2: i32) -> (i32, i32, i32) {
    %c0_i32 = arith.constant 0 : i32
    return %arg0, %arg1, %arg2 : i32, i32, i32
  }
  func.func @transform_1(%arg0: i32, %arg1: i32, %arg2: i32) -> (i32, i32) {
    %c0_i32 = arith.constant 0 : i32
    %c0_i32_0 = arith.constant 0 : i32
    return %c0_i32, %arg2 : i32, i32
  }
  func.func @transform_2(%arg0: i32, %arg1: i32, %arg2: i32) -> (i32, i32) {
    %c0_i32 = arith.constant 0 : i32
    %c0_i32_0 = arith.constant 0 : i32
    return %c0_i32, %arg2 : i32, i32
  }
  func.func @transform_3(%arg0: i32, %arg1: i32, %arg2: i32) -> (i32, i32, i32) {
    %c0_i32 = arith.constant 0 : i32
    return %arg0, %arg1, %arg2 : i32, i32, i32
  }
}

module attributes {stable_mosaic.version = 11 : i64} {
  func.func @_gemm_tanh_kernel(%arg0: i32, %arg1: i32, %arg2: i32, %arg3: i32, %arg4: memref<1x128x128xbf16, #tpu.memory_space<vmem>>, %arg5: memref<1x128x128xbf16, #tpu.memory_space<vmem>>, %arg6: memref<1x128x128xf32, #tpu.memory_space<vmem>>, %arg7: memref<128x128xf32, #tpu.memory_space<vmem>>) attributes {dimension_semantics = [#tpu.dimension_semantics<parallel>, #tpu.dimension_semantics<parallel>, #tpu.dimension_semantics<parallel>, #tpu.dimension_semantics<arbitrary>], iteration_bounds = array<i64: 4, 1, 1, 1>, scalar_prefetch = 0 : i64, scratch_operands = 1 : i64, tpu.core_type = #tpu.core_type<tc>, window_params = [{transform_indices = @transform_0, window_bounds = array<i64: 1, 128, 128>}, {transform_indices = @transform_1, window_bounds = array<i64: 1, 128, 128>}, {transform_indices = @transform_2, window_bounds = array<i64: 1, 128, 128>}]} {
    %c0_i32 = arith.constant 0 : i32
    %0 = arith.cmpi eq, %arg3, %c0_i32 : i32
    %1 = arith.extui %0 : i1 to i32
    %c0_i32_0 = arith.constant 0 : i32
    %2 = arith.cmpi ne, %1, %c0_i32_0 : i32
    scf.if %2 {
      %cst_12 = arith.constant 0.000000e+00 : f32
      %14 = vector.broadcast %cst_12 : f32 to vector<128x128xf32>
      %c0_13 = arith.constant 0 : index
      %c0_14 = arith.constant 0 : index
      %15 = vector.load %arg7[%c0_13, %c0_14] : memref<128x128xf32, #tpu.memory_space<vmem>>, vector<128x128xf32>
      tpu.vector_store %arg7[%c0_13, %c0_14], %14 {strides = array<i32>} : memref<128x128xf32, #tpu.memory_space<vmem>>, vector<128x128xf32>,
    } else {
    }
    %c0 = arith.constant 0 : index
    %c0_1 = arith.constant 0 : index
    %3 = vector.load %arg7[%c0, %c0_1] : memref<128x128xf32, #tpu.memory_space<vmem>>, vector<128x128xf32>
    %c0_2 = arith.constant 0 : index
    %c0_3 = arith.constant 0 : index
    %c0_4 = arith.constant 0 : index
    %4 = vector.load %arg4[%c0_2, %c0_3, %c0_4] : memref<1x128x128xbf16, #tpu.memory_space<vmem>>, vector<1x128x128xbf16>
    %5 = vector.shape_cast %4 : vector<1x128x128xbf16> to vector<128x128xbf16>
    %c0_5 = arith.constant 0 : index
    %c0_6 = arith.constant 0 : index
    %c0_7 = arith.constant 0 : index
    %6 = vector.load %arg5[%c0_5, %c0_6, %c0_7] : memref<1x128x128xbf16, #tpu.memory_space<vmem>>, vector<1x128x128xbf16>
    %7 = vector.shape_cast %6 : vector<1x128x128xbf16> to vector<128x128xbf16>
    %cst = arith.constant dense<0.000000e+00> : vector<128x128xf32>
    %8 = tpu.matmul %5, %7, %cst {dimension_numbers = #tpu.dot_dimension_numbers<[1], [0], [0], [1], [0, 0, 1, 1], [], []>} : vector<128x128xbf16>, vector<128x128xbf16>, vector<128x128xf32> -> vector<128x128xf32>
    %9 = arith.addf %3, %8 : vector<128x128xf32>
    %c0_8 = arith.constant 0 : index
    %c0_9 = arith.constant 0 : index
    %10 = vector.load %arg7[%c0_8, %c0_9] : memref<128x128xf32, #tpu.memory_space<vmem>>, vector<128x128xf32>
    tpu.vector_store %arg7[%c0_8, %c0_9], %9 {strides = array<i32>} : memref<128x128xf32, #tpu.memory_space<vmem>>, vector<128x128xf32>,
    %c0_i32_10 = arith.constant 0 : i32
    %11 = arith.cmpi eq, %arg3, %c0_i32_10 : i32
    %12 = arith.extui %11 : i1 to i32
    %c0_i32_11 = arith.constant 0 : i32
    %13 = arith.cmpi ne, %12, %c0_i32_11 : i32
    scf.if %13 {
      %c0_12 = arith.constant 0 : index
      %c0_13 = arith.constant 0 : index
      %14 = vector.load %arg7[%c0_12, %c0_13] : memref<128x128xf32, #tpu.memory_space<vmem>>, vector<128x128xf32>
      %15 = math.tanh %14 : vector<128x128xf32>
      %c0_14 = arith.constant 0 : index
      %c0_15 = arith.constant 0 : index
      %c0_16 = arith.constant 0 : index
      %16 = vector.load %arg6[%c0_14, %c0_15, %c0_16] : memref<1x128x128xf32, #tpu.memory_space<vmem>>, vector<1x128x128xf32>
      %17 = vector.shape_cast %16 : vector<1x128x128xf32> to vector<128x128xf32>
      %18 = vector.shape_cast %15 : vector<128x128xf32> to vector<1x128x128xf32>
      tpu.vector_store %arg6[%c0_14, %c0_15, %c0_16], %18 {strides = array<i32>} : memref<1x128x128xf32, #tpu.memory_space<vmem>>, vector<1x128x128xf32>,
    } else {
    }
    return
  }
  func.func @transform_0(%arg0: i32, %arg1: i32, %arg2: i32, %arg3: i32) -> (i32, i32, i32) {
    %c0_i32 = arith.constant 0 : i32
    return %arg0, %arg1, %arg3 : i32, i32, i32
  }
  func.func @transform_1(%arg0: i32, %arg1: i32, %arg2: i32, %arg3: i32) -> (i32, i32, i32) {
    %c0_i32 = arith.constant 0 : i32
    return %arg0, %arg3, %arg2 : i32, i32, i32
  }
  func.func @transform_2(%arg0: i32, %arg1: i32, %arg2: i32, %arg3: i32) -> (i32, i32, i32) {
    %c0_i32 = arith.constant 0 : i32
    return %arg0, %arg1, %arg2 : i32, i32, i32
  }
}

</mosaic_0001>

<llo_original>
// kernel: squeeze.9
$region0: #{squeeze.9}
  %s0 = inlined_call_operand.vmem [shape: f32[256], index: 0, kind: input, shape index: {}]
  %s1 = inlined_call_operand.vmem [shape: f32[16,16], index: 1, kind: output, shape index: {}]
  $region1: #{squeeze.9} parent=0
    #allocation0 [shape = 'u8[4096]{0}', space=vmem, size = 0x1000, scoped, tag = 'scoped mem for input reshape']
    %s3 = sshllo.u32 0, 2
    %v4 = vld [vmem:[%s0] sm:%s3]
    %5 = vst [vmem:[#allocation0] sm:%s3] %v4
    %v6 = vld [vmem:[#allocation0] sm:$0x3]
    %vm7 = vcmask 130048
    %8 = vst.msk [vmem:[%s1] ss:$8 sm:$0x3] %vm7, %v6
    %v9 = vld [vmem:[#allocation0] sm:$0x3]
    %10 = vrot.lane.b32.xlu0 %v9, 112
    %v11 = vpop.permute.xlu0 %10
    %vm12 = vcmask 130048
    %s13 = scalar_lea.vmem %s1, 1
    %14 = vst.msk [vmem:[%s13] ss:$8 sm:$0x3] %vm12, %v11
    %v15 = vld [vmem:[#allocation0] sm:$0x3]
    %16 = vrot.lane.b32.xlu0 %v15, 96
    %v17 = vpop.permute.xlu0 %16
    %vm18 = vcmask 130048
    %s19 = scalar_lea.vmem %s1, 2
    %20 = vst.msk [vmem:[%s19] ss:$8 sm:$0x3] %vm18, %v17
    %v21 = vld [vmem:[#allocation0] sm:$0x3]
    %22 = vrot.lane.b32.xlu0 %v21, 80
    %v23 = vpop.permute.xlu0 %22
    %vm24 = vcmask 130048
    %s25 = scalar_lea.vmem %s1, 3
    %26 = vst.msk [vmem:[%s25] ss:$8 sm:$0x3] %vm24, %v23
    %v27 = vld [vmem:[#allocation0] sm:$0x3]
    %28 = vrot.lane.b32.xlu0 %v27, 64
    %v29 = vpop.permute.xlu0 %28
    %vm30 = vcmask 130048
    %s31 = scalar_lea.vmem %s1, 4
    %32 = vst.msk [vmem:[%s31] ss:$8 sm:$0x3] %vm30, %v29
    %v33 = vld [vmem:[#allocation0] sm:$0x3]
    %34 = vrot.lane.b32.xlu0 %v33, 48
    %v35 = vpop.permute.xlu0 %34
    %vm36 = vcmask 130048
    %s37 = scalar_lea.vmem %s1, 5
    %38 = vst.msk [vmem:[%s37] ss:$8 sm:$0x3] %vm36, %v35
    %v39 = vld [vmem:[#allocation0] sm:$0x3]
    %40 = vrot.lane.b32.xlu0 %v39, 32
    %v41 = vpop.permute.xlu0 %40
    %vm42 = vcmask 130048
    %s43 = scalar_lea.vmem %s1, 6
    %44 = vst.msk [vmem:[%s43] ss:$8 sm:$0x3] %vm42, %v41
    %v45 = vld [vmem:[#allocation0] sm:$0x3]
    %46 = vrot.lane.b32.xlu0 %v45, 16
    %v47 = vpop.permute.xlu0 %46
    %vm48 = vcmask 130048
    %s49 = scalar_lea.vmem %s1, 7
    %50 = vst.msk [vmem:[%s49] ss:$8 sm:$0x3] %vm48, %v47

// kernel: tile.18
$region0: #{tile.18}
  #allocation0 [shape = 's32[1]{0}', space=sflag, size = 0x4, scoped, tag = 'scoped memory for tile.18']
  %s0 = inlined_call_operand.vmem [shape: f32[16], index: 0, kind: input, shape index: {}]
  %s1 = inlined_call_operand.vmem [shape: f32[16,16], index: 1, kind: output, shape index: {}]
  // Predicated region
  $region2: #{tile.18} parent=0 // pred_check
    _
  $region3: #{tile.18} parent=0 // pred_check_branch
    %3 = sbr.rel (0) target = $region5
  $region4: #{tile.18} parent=0 // pred_region
    _
  $region5: #{tile.18} parent=0 // pred_fallthru
    _
  %v4 = vld [vmem:[%s0] ss:$0 sm:$0xff]
  %5 = vst [vmem:[%s1] sm:$0xff] %v4
  %s6 = scalar_lea.vmem %s1, 8
  %7 = vst [vmem:[%s6] sm:$0xff] %v4

// kernel: squeeze.11
$region0: #{squeeze.11}
  %s0 = inlined_call_operand.vmem [shape: bf16[1,2,256], index: 0, kind: input, shape index: {}]
  %s1 = inlined_call_operand.vmem [shape: bf16[2,4,4,16], index: 1, kind: output, shape index: {}]
  $region1: #{squeeze.11} parent=0
    #allocation0 [shape = 'u8[32768]{0}', space=vmem, size = 0x8000, scoped, tag = 'scoped mem for output reshape']
    #allocation1 [shape = 'u8[8192]{0}', space=vmem, size = 0x2000, scoped, tag = 'scoped mem for input reshape']
    %s3 = smul.u32 1, 2
    %s4 = sshllo.u32 0, %s3
    %s5 = scalar_lea.vmem %s0, 1
    %s6 = sshrl.u32 %s4, 1
    %s7 = sor.u32 %s4, %s6
    %s8 = sand.u32 %s7, 85
    %s9 = sshrl.u32 %s8, 1
    %s10 = sor.u32 %s8, %s9
    %s11 = sand.u32 51, %s10
    %s12 = sshrl.u32 %s11, 2
    %s13 = sor.u32 %s11, %s12
    %s14 = sand.u32 15, %s13
    %v15 = vld [vmem:[%s5] sm:%s14]
    %v16 = vunpack.c.l.bf16 %v15
    %v17 = vunpack.c.h.bf16 %v15
    %s18 = scalar_lea.vmem [#allocation1], 8
    %19 = vst [vmem:[%s18] sm:%s4] %v16
    %s20 = sshrl.u32 %s4, 1
    %s21 = sor.u32 %s4, %s20
    %s22 = sand.u32 %s21, 85
    %s23 = sshrl.u32 %s22, 1
    %s24 = sor.u32 %s22, %s23
    %s25 = sand.u32 51, %s24
    %s26 = sshrl.u32 %s25, 2
    %s27 = sor.u32 %s25, %s26
    %s28 = sand.u32 15, %s27
    %v29 = vld [vmem:[%s0] sm:%s28]
    %v30 = vunpack.c.l.bf16 %v29
    %v31 = vunpack.c.h.bf16 %v29
    %32 = vst [vmem:[#allocation1] sm:%s4] %v30
    %v33 = vld [vmem:[#allocation1] sm:$0x3]
    %vm34 = vcmask 130048
    %35 = vst.msk [vmem:[#allocation0] sm:$0x1] %vm34, %v33
    %s36 = scalar_lea.vmem [#allocation0], 31
    %37 = vst.msk [vmem:[%s36] sm:$0x2] %vm34, %v33
    %s38 = scalar_lea.vmem [#allocation1], 8
    %v39 = vld [vmem:[%s38] sm:$0x3]
    %vm40 = vcmask 130048
    %s41 = scalar_lea.vmem [#allocation0], 16
    %42 = vst.msk [vmem:[%s41] sm:$0x1] %vm40, %v39
    %s43 = scalar_lea.vmem [#allocation0], 47
    %44 = vst.msk [vmem:[%s43] sm:$0x2] %vm40, %v39
    %v45 = vld.sshfl [vmem:[#allocation1] sm:$0xff pattern:$0x99999180]
    %46 = vrot.lane.b32.xlu0 %v45, 112
    %v47 = vpop.permute.xlu0 %46
    %vm48 = vcmask 130048
    %s49 = scalar_lea.vmem [#allocation0], 1
    %50 = vst.msk [vmem:[%s49] ss:$16 sm:$0x3] %vm48, %v47
    %s51 = scalar_lea.vmem [#allocation0], 1
    %52 = vst.msk [vmem:[%s51] ss:$16 sm:$0xc] %vm48, %v47
    %v53 = vld.sshfl [vmem:[#allocation1] sm:$0xff pattern:$0x99999180]
    %54 = vrot.lane.b32.xlu0 %v53, 96
    %v55 = vpop.permute.xlu0 %54
    %vm56 = vcmask 130048
    %s57 = scalar_lea.vmem [#allocation0], 2
    %58 = vst.msk [vmem:[%s57] ss:$16 sm:$0x3] %vm56, %v55
    %s59 = scalar_lea.vmem [#allocation0], 2
    %60 = vst.msk [vmem:[%s59] ss:$16 sm:$0xc] %vm56, %v55
    %v61 = vld.sshfl [vmem:[#allocation1] sm:$0xff pattern:$0x99999180]
    %62 = vrot.lane.b32.xlu0 %v61, 80
    %v63 = vpop.permute.xlu0 %62
    %vm64 = vcmask 130048
    %s65 = scalar_lea.vmem [#allocation0], 3
    %66 = vst.msk [vmem:[%s65] ss:$16 sm:$0x3] %vm64, %v63
    %s67 = scalar_lea.vmem [#allocation0], 3
    %68 = vst.msk [vmem:[%s67] ss:$16 sm:$0xc] %vm64, %v63
    %v69 = vld.sshfl [vmem:[#allocation1] sm:$0xff pattern:$0x99999180]
    %70 = vrot.lane.b32.xlu0 %v69, 64
    %v71 = vpop.permute.xlu0 %70
    %vm72 = vcmask 130048
    %s73 = scalar_lea.vmem [#allocation0], 8
    %74 = vst.msk [vmem:[%s73] ss:$16 sm:$0x3] %vm72, %v71
    %s75 = scalar_lea.vmem [#allocation0], 8
    %76 = vst.msk [vmem:[%s75] ss:$16 sm:$0xc] %vm72, %v71
    %v77 = vld.sshfl [vmem:[#allocation1] sm:$0xff pattern:$0x99999180]
    %78 = vrot.lane.b32.xlu0 %v77, 48
    %v79 = vpop.permute.xlu0 %78
    %vm80 = vcmask 130048
    %s81 = scalar_lea.vmem [#allocation0], 9
    %82 = vst.msk [vmem:[%s81] ss:$16 sm:$0x3] %vm80, %v79
    %s83 = scalar_lea.vmem [#allocation0], 9
    %84 = vst.msk [vmem:[%s83] ss:$16 sm:$0xc] %vm80, %v79
    %v85 = vld.sshfl [vmem:[#allocation1] sm:$0xff pattern:$0x99999180]
    %86 = vrot.lane.b32.xlu0 %v85, 32
    %v87 = vpop.permute.xlu0 %86
    %vm88 = vcmask 130048
    %s89 = scalar_lea.vmem [#allocation0], 10
    %90 = vst.msk [vmem:[%s89] ss:$16 sm:$0x3] %vm88, %v87
    %s91 = scalar_lea.vmem [#allocation0], 10
    %92 = vst.msk [vmem:[%s91] ss:$16 sm:$0xc] %vm88, %v87
    %v93 = vld.sshfl [vmem:[#allocation1] sm:$0xff pattern:$0x99999180]
    %94 = vrot.lane.b32.xlu0 %v93, 16
    %v95 = vpop.permute.xlu0 %94
    %vm96 = vcmask 130048
    %s97 = scalar_lea.vmem [#allocation0], 11
    %98 = vst.msk [vmem:[%s97] ss:$16 sm:$0x3] %vm96, %v95
    %s99 = scalar_lea.vmem [#allocation0], 11
    %100 = vst.msk [vmem:[%s99] ss:$16 sm:$0xc] %vm96, %v95
    %s102 = smul.u32 2, 2
    %s103 = sshllo.u32 0, %s102
    %s104 = sshrl.u32 %s102, 1
    %v105 = vld [vmem:[#allocation0] sm:%s103]
    %v106 = vpack.c.bf16 0.0, %v105
    %s107 = sshllo.u32 0, %s104
    %108 = vst [vmem:[%s1] sm:%s107] %v106
    %s109 = scalar_lea.vmem [#allocation0], 8
    %v110 = vld [vmem:[%s109] sm:%s103]
    %v111 = vpack.c.bf16 0.0, %v110
    %s112 = sshllo.u32 0, %s104
    %s113 = scalar_lea.vmem %s1, 2
    %114 = vst [vmem:[%s113] sm:%s112] %v111
    %s115 = scalar_lea.vmem [#allocation0], 16
    %v116 = vld [vmem:[%s115] sm:%s103]
    %v117 = vpack.c.bf16 0.0, %v116
    %s118 = sshllo.u32 0, %s104
    %s119 = smul.addr 2, 2
    %s120 = scalar_lea.vmem %s1, %s119
    %121 = vst [vmem:[%s120] sm:%s118] %v117
    %s122 = scalar_lea.vmem [#allocation0], 24
    %v123 = vld [vmem:[%s122] sm:%s103]
    %v124 = vpack.c.bf16 0.0, %v123
    %s125 = sshllo.u32 0, %s104
    %s126 = smul.addr 2, 3
    %s127 = scalar_lea.vmem %s1, %s126
    %128 = vst [vmem:[%s127] sm:%s125] %v124
    %s129 = scalar_lea.vmem [#allocation0], 32
    %v130 = vld [vmem:[%s129] sm:%s103]
    %v131 = vpack.c.bf16 0.0, %v130
    %s132 = sshllo.u32 0, %s104
    %s133 = smul.addr 2, 4
    %s134 = scalar_lea.vmem %s1, %s133
    %135 = vst [vmem:[%s134] sm:%s132] %v131
    %s136 = scalar_lea.vmem [#allocation0], 40
    %v137 = vld [vmem:[%s136] sm:%s103]
    %v138 = vpack.c.bf16 0.0, %v137
    %s139 = sshllo.u32 0, %s104
    %s140 = smul.addr 2, 5
    %s141 = scalar_lea.vmem %s1, %s140
    %142 = vst [vmem:[%s141] sm:%s139] %v138
    %s143 = scalar_lea.vmem [#allocation0], 48
    %v144 = vld [vmem:[%s143] sm:%s103]
    %v145 = vpack.c.bf16 0.0, %v144
    %s146 = sshllo.u32 0, %s104
    %s147 = smul.addr 2, 6
    %s148 = scalar_lea.vmem %s1, %s147
    %149 = vst [vmem:[%s148] sm:%s146] %v145
    %s150 = scalar_lea.vmem [#allocation0], 56
    %v151 = vld [vmem:[%s150] sm:%s103]
    %v152 = vpack.c.bf16 0.0, %v151
    %s153 = sshllo.u32 0, %s104
    %s154 = smul.addr 2, 7
    %s155 = scalar_lea.vmem %s1, %s154
    %156 = vst [vmem:[%s155] sm:%s153] %v152

// kernel: decoder_forward.6
$region0: #{decoder_forward.6}
  #allocation0 [shape = 'u32[]', space=smem, size = 0x4, offset = 0x4, fixed_abs, tag = 'smem constant byte address 0x4 - core index']
  #allocation1 [shape = 'u32[144,128]{1,0:T(1,128)}', space=vmem, size = 0x12000, scoped, tag = 'internal scratch']
  %s0 = inlined_call_operand.vmem [shape: f32[1,16,256], index: 0, kind: input, shape index: {}]
  %s1 = inlined_call_operand.vmem [shape: f32[1,256], index: 1, kind: input, shape index: {}]
  %s2 = inlined_call_operand.vmem [shape: f32[1,256], index: 2, kind: input, shape index: {}]
  %s3 = inlined_call_operand.vmem [shape: bf16[1,16,256], index: 3, kind: output, shape index: {}]
  %s4 = sld [smem:[#allocation0]]
  $region22: #{decoder_forward.6} parent=0
    _
  %s6 = ssub.s32 1, %s4
  %s7 = scalar_select 0, %s6, %s4
  // Predicated region
  $region2: #{decoder_forward.6} parent=0 // pred_check
    _
  $region3: #{decoder_forward.6} parent=0 // pred_check_branch
    %9 = sbr.rel (0) target = $region5
  $region4: #{decoder_forward.6} parent=0 // pred_region
    _
  $region5: #{decoder_forward.6} parent=0 // pred_fallthru
    _
  // Predicated region
  $region6: #{decoder_forward.6} parent=0 // pred_check
    _
  $region7: #{decoder_forward.6} parent=0 // pred_check_branch
    %11 = sbr.rel (0) target = $region9
  $region8: #{decoder_forward.6} parent=0 // pred_region
    _
  $region9: #{decoder_forward.6} parent=0 // pred_fallthru
    _
  // Predicated region
  $region10: #{decoder_forward.6} parent=0 // pred_check
    _
  $region11: #{decoder_forward.6} parent=0 // pred_check_branch
    %13 = sbr.rel (0) target = $region13
  $region12: #{decoder_forward.6} parent=0 // pred_region
    _
  $region13: #{decoder_forward.6} parent=0 // pred_fallthru
    _
  %v14 = vld [vmem:[%s0] sm:$0xff]
  %v15 = vld [vmem:[%s0 + $0x8] sm:$0xff]
  %v16 = vld [vmem:[%s0 + $0x10] sm:$0xff]
  %v17 = vld [vmem:[%s0 + $0x18] sm:$0xff]
  %v18 = vld [vmem:[%s1] sm:$0x3]
  %v20 = vlaneseq
  %v21 = vshrl.u32 %v20, 7
  %v22 = vsub.s32 0, %v21
  %v23 = vrot.slane %v18, %v22
  %v24 = vlaneseq
  %v25 = vshrl.u32 %v24, 7
  %v26 = vsub.s32 1, %v25
  %v27 = vrot.slane %v18, %v26
  %v30 = vmul.f32 %v14, %v23
  %v31 = vmul.f32 %v15, %v27
  %v32 = vmul.f32 %v16, %v23
  %v33 = vmul.f32 %v17, %v27
  %v34 = vld [vmem:[%s2] sm:$0x3]
  %v36 = vlaneseq
  %v37 = vshrl.u32 %v36, 7
  %v38 = vsub.s32 0, %v37
  %v39 = vrot.slane %v34, %v38
  %v40 = vlaneseq
  %v41 = vshrl.u32 %v40, 7
  %v42 = vsub.s32 1, %v41
  %v43 = vrot.slane %v34, %v42
  %v46 = vadd.f32 %v30, %v39
  %v47 = vadd.f32 %v31, %v43
  %v48 = vadd.f32 %v32, %v39
  %v49 = vadd.f32 %v33, %v43
  %v50 = vmax.f32 %v46, 0.0
  %v51 = vmax.f32 %v47, 0.0
  %v52 = vmax.f32 %v48, 0.0
  %v53 = vmax.f32 %v49, 0.0
  %v54 = vpack.c.bf16 %v52, %v50
  %v55 = vpack.c.bf16 %v53, %v51
  %v58 = vunpack.c.l.b16 %v54
  %v59 = vunpack.c.l.b16 %v55
  %v60 = vunpack.c.h.b16 %v54
  %v61 = vunpack.c.h.b16 %v55
  %v62 = vpack.c.b16 %v59, %v58
  %v63 = vpack.c.b16 %v61, %v60
  %66 = vst [vmem:[%s3] sm:$0xff] %v62
  %67 = vst [vmem:[%s3 + $0x8] sm:$0xff] %v63
  // Predicated region
  $region14: #{decoder_forward.6} parent=0 // pred_check
    _
  $region15: #{decoder_forward.6} parent=0 // pred_check_branch
    %69 = sbr.rel (0) target = $region17
  $region16: #{decoder_forward.6} parent=0 // pred_region
    _
  $region17: #{decoder_forward.6} parent=0 // pred_fallthru
    _
  // Predicated region
  $region18: #{decoder_forward.6} parent=0 // pred_check
    _
  $region19: #{decoder_forward.6} parent=0 // pred_check_branch
    %71 = sbr.rel (0) target = $region21
  $region20: #{decoder_forward.6} parent=0 // pred_region
    _
  $region21: #{decoder_forward.6} parent=0 // pred_fallthru
    _

// kernel: decoder_forward.5
$region0: #{decoder_forward.5}
  #allocation0 [shape = 'u32[]', space=smem, size = 0x4, offset = 0x4, fixed_abs, tag = 'smem constant byte address 0x4 - core index']
  #allocation1 [shape = 'u32[144,128]{1,0:T(1,128)}', space=vmem, size = 0x12000, scoped, tag = 'internal scratch']
  #allocation2 [shape = 'f32[16,256]{1,0:T(8,128)}', space=vmem, size = 0x4000, scoped, tag = 'scratch operand']
  %s0 = inlined_call_operand.hbm [shape: bf16[1,16,128], index: 0, kind: input, shape index: {}]
  %s1 = inlined_call_operand.hbm [shape: bf16[1,128,256], index: 1, kind: input, shape index: {}]
  %s2 = inlined_call_operand.hbm [shape: f32[1,16,256], index: 2, kind: output, shape index: {0}]
  %s3 = inlined_call_operand.hbm [shape: f32[1,8,256], index: 3, kind: output, shape index: {1}]
  %4 = xla_tuple %s2, %s3
  %s5 = sld [smem:[#allocation0]]
  $region42: #{decoder_forward.5} parent=0
    _
  %s7 = ssub.s32 1, %s5
  %s8 = scalar_select 0, %s7, %s5
  $region1: #{decoder_forward.5} parent=0
    #allocation3 [shape = 'u8[4096]{0}', space=vmem, size = 0x1000, scoped, tag = 'input window, operand 0, single buffered']
    #allocation4 [shape = 's32[1]{0}', space=sflag, size = 0x4, scoped, tag = 'scoped memory for decoder_forward.5']
    #allocation5 [shape = 's32[1]{0}', space=sflag, size = 0x4, scoped, tag = 'scoped memory for decoder_forward.5']
    #allocation6 [shape = 'u8[65536]{0}', space=vmem, size = 0x10000, scoped, tag = 'input window, operand 1, single buffered']
    #allocation7 [shape = 's32[1]{0}', space=sflag, size = 0x4, scoped, tag = 'scoped memory for decoder_forward.5']
    #allocation8 [shape = 'u8[16384]{0}', space=vmem, size = 0x4000, scoped, tag = 'output window, operand 0, single buffered']
    #allocation9 [shape = 'u8[8192]{0}', space=vmem, size = 0x2000, scoped, tag = 'output window, operand 1, single buffered']
    #allocation10 [shape = 's32[1]{0}', space=sflag, size = 0x4, scoped, tag = 'scoped memory for decoder_forward.5']
    %9 = vsyncpa [#allocation4], 0
    %10 = vsyncpa [#allocation7], 0
    %11 = vsyncpa [#allocation5], 0
    %12 = vsyncpa [#allocation10], 0
    // Predicated region
    $region2: #{decoder_forward.5} parent=1 // pred_check
      _
    $region3: #{decoder_forward.5} parent=1 // pred_check_branch
      %14 = sbr.rel (0) target = $region5
    $region4: #{decoder_forward.5} parent=1 // pred_region
      %s16 = ssub.s32 128, 128
      %17 = vsyncadd [#allocation4], %s16
      %s18 = sshll.u32 [#allocation3], 4
      %s19 = int_to_ptr.vmem [resolvable:$true] %s18
      %24 = dma.hbm_to_vmem [thread:$0]  %s0, 128, %s19, [#allocation4], 64, 64, 4
    $region5: #{decoder_forward.5} parent=1 // pred_fallthru
      _
    // Predicated region
    $region6: #{decoder_forward.5} parent=1 // pred_check
      _
    $region7: #{decoder_forward.5} parent=1 // pred_check_branch
      %26 = sbr.rel (0) target = $region9
    $region8: #{decoder_forward.5} parent=1 // pred_region
      %s28 = ssub.s32 2048, 2048
      %29 = vsyncadd [#allocation7], %s28
      %s30 = sshll.u32 [#allocation6], 4
      %s31 = int_to_ptr.vmem [resolvable:$true] %s30
      %36 = dma.hbm_to_vmem [thread:$0]  %s1, 2048, %s31, [#allocation7], 128, 128, 8
    $region9: #{decoder_forward.5} parent=1 // pred_fallthru
      _
    // Predicated region
    $region10: #{decoder_forward.5} parent=1 // pred_check
      _
    $region11: #{decoder_forward.5} parent=1 // pred_check_branch
      %38 = sbr.rel (0) target = $region13
    $region12: #{decoder_forward.5} parent=1 // pred_region
      %39 = dma.done [#allocation4], 128
    $region13: #{decoder_forward.5} parent=1 // pred_fallthru
      _
    // Predicated region
    $region14: #{decoder_forward.5} parent=1 // pred_check
      _
    $region15: #{decoder_forward.5} parent=1 // pred_check_branch
      %41 = sbr.rel (0) target = $region17
    $region16: #{decoder_forward.5} parent=1 // pred_region
      %42 = dma.done [#allocation7], 2048
    $region17: #{decoder_forward.5} parent=1 // pred_fallthru
      _
    %p44 = scmp.eq.s32.totalorder 0, 0
    // Predicated region
    $region18: #{decoder_forward.5} parent=1 // pred_check
      %p45 = pneg %p44
    $region19: #{decoder_forward.5} parent=1 // pred_check_branch
      %47 = sbr.rel (%p45) target = $region21
    $region20: #{decoder_forward.5} parent=1 // pred_region
      %48 = vst [vmem:[#allocation2] sm:$0xff] 0.0
      %49 = vst [vmem:[#allocation2 + $0x8] sm:$0xff] 0.0
      %50 = vst [vmem:[#allocation2 + $0x10] sm:$0xff] 0.0
      %51 = vst [vmem:[#allocation2 + $0x18] sm:$0xff] 0.0
    $region21: #{decoder_forward.5} parent=1 // pred_fallthru
      _
    %v52 = vld [vmem:[#allocation2] sm:$0xff]
    %v53 = vld [vmem:[#allocation2 + $0x8] sm:$0xff]
    %v54 = vld [vmem:[#allocation2 + $0x10] sm:$0xff]
    %v55 = vld [vmem:[#allocation2 + $0x18] sm:$0xff]
    %v56 = vld [vmem:[#allocation3] sm:$0xf]
    %v57 = vld [vmem:[#allocation3 + $0x4] sm:$0xf]
    %v58 = vld [vmem:[#allocation6] sm:$0xff]
    %v59 = vld [vmem:[#allocation6 + $0x8] sm:$0xff]
    %v60 = vld [vmem:[#allocation6 + $0x10] sm:$0xff]
    %v61 = vld [vmem:[#allocation6 + $0x18] sm:$0xff]
    %v62 = vld [vmem:[#allocation6 + $0x20] sm:$0xff]
    %v63 = vld [vmem:[#allocation6 + $0x28] sm:$0xff]
    %v64 = vld [vmem:[#allocation6 + $0x30] sm:$0xff]
    %v65 = vld [vmem:[#allocation6 + $0x38] sm:$0xff]
    %v66 = vld [vmem:[#allocation6 + $0x40] sm:$0xff]
    %v67 = vld [vmem:[#allocation6 + $0x48] sm:$0xff]
    %v68 = vld [vmem:[#allocation6 + $0x50] sm:$0xff]
    %v69 = vld [vmem:[#allocation6 + $0x58] sm:$0xff]
    %v70 = vld [vmem:[#allocation6 + $0x60] sm:$0xff]
    %v71 = vld [vmem:[#allocation6 + $0x68] sm:$0xff]
    %v72 = vld [vmem:[#allocation6 + $0x70] sm:$0xff]
    %v73 = vld [vmem:[#allocation6 + $0x78] sm:$0xff]
    %v76 = vunpack.c.l.b16 %v56
    %v77 = vunpack.c.l.b16 %v57
    %v78 = vpack.c.b16 %v77, %v76
    %v96 = vunpack.c.l.b16 %v58
    %v97 = vunpack.c.h.b16 %v58
    %v98 = vunpack.c.l.b16 %v59
    %v99 = vunpack.c.h.b16 %v59
    %v100 = vunpack.c.l.b16 %v60
    %v101 = vunpack.c.h.b16 %v60
    %v102 = vunpack.c.l.b16 %v61
    %v103 = vunpack.c.h.b16 %v61
    %v104 = vunpack.c.l.b16 %v62
    %v105 = vunpack.c.h.b16 %v62
    %v106 = vunpack.c.l.b16 %v63
    %v107 = vunpack.c.h.b16 %v63
    %v108 = vunpack.c.l.b16 %v64
    %v109 = vunpack.c.h.b16 %v64
    %v110 = vunpack.c.l.b16 %v65
    %v111 = vunpack.c.h.b16 %v65
    %v112 = vunpack.c.l.b16 %v66
    %v113 = vunpack.c.h.b16 %v66
    %v114 = vunpack.c.l.b16 %v67
    %v115 = vunpack.c.h.b16 %v67
    %v116 = vunpack.c.l.b16 %v68
    %v117 = vunpack.c.h.b16 %v68
    %v118 = vunpack.c.l.b16 %v69
    %v119 = vunpack.c.h.b16 %v69
    %v120 = vunpack.c.l.b16 %v70
    %v121 = vunpack.c.h.b16 %v70
    %v122 = vunpack.c.l.b16 %v71
    %v123 = vunpack.c.h.b16 %v71
    %v124 = vunpack.c.l.b16 %v72
    %v125 = vunpack.c.h.b16 %v72
    %v126 = vunpack.c.l.b16 %v73
    %v127 = vunpack.c.h.b16 %v73
    %v128 = vpack.c.b16 %v98, %v96
    %v129 = vpack.c.b16 %v99, %v97
    %v130 = vpack.c.b16 %v102, %v100
    %v131 = vpack.c.b16 %v103, %v101
    %v132 = vpack.c.b16 %v106, %v104
    %v133 = vpack.c.b16 %v107, %v105
    %v134 = vpack.c.b16 %v110, %v108
    %v135 = vpack.c.b16 %v111, %v109
    %v136 = vpack.c.b16 %v114, %v112
    %v137 = vpack.c.b16 %v115, %v113
    %v138 = vpack.c.b16 %v118, %v116
    %v139 = vpack.c.b16 %v119, %v117
    %v140 = vpack.c.b16 %v122, %v120
    %v141 = vpack.c.b16 %v123, %v121
    %v142 = vpack.c.b16 %v126, %v124
    %v143 = vpack.c.b16 %v127, %v125
    %160 = vmatprep.subr.bf16.mxu0 %v129
    %161 = vmatpush1.bf16.msra.mxu0 %v128
    %162 = vmatprep.subr.bf16.mxu0 %v131
    %163 = vmatpush1.bf16.msra.mxu0 %v130
    %164 = vmatprep.subr.bf16.mxu0 %v133
    %165 = vmatpush1.bf16.msra.mxu0 %v132
    %166 = vmatprep.subr.bf16.mxu0 %v135
    %167 = vmatpush1.bf16.msra.mxu0 %v134
    %168 = vmatprep.subr.bf16.mxu0 %v137
    %169 = vmatpush1.bf16.msra.mxu0 %v136
    %170 = vmatprep.subr.bf16.mxu0 %v139
    %171 = vmatpush1.bf16.msra.mxu0 %v138
    %172 = vmatprep.subr.bf16.mxu0 %v141
    %173 = vmatpush1.bf16.msra.mxu0 %v140
    %174 = vmatprep.subr.bf16.mxu0 %v143
    %175 = vmatpush1.bf16.msra.mxu0 %v142
    %176 = vmatprep.subr.bf16.mxu0 0
    %177 = vmatpush1.bf16.msra.mxu0 0
    %178 = vmatprep.subr.bf16.mxu0 0
    %179 = vmatpush1.bf16.msra.mxu0 0
    %180 = vmatprep.subr.bf16.mxu0 0
    %181 = vmatpush1.bf16.msra.mxu0 0
    %182 = vmatprep.subr.bf16.mxu0 0
    %183 = vmatpush1.bf16.msra.mxu0 0
    %184 = vmatprep.subr.bf16.mxu0 0
    %185 = vmatpush1.bf16.msra.mxu0 0
    %186 = vmatprep.subr.bf16.mxu0 0
    %187 = vmatpush1.bf16.msra.mxu0 0
    %188 = vmatprep.subr.bf16.mxu0 0
    %189 = vmatpush1.bf16.msra.mxu0 0
    %190 = vmatprep.subr.bf16.mxu0 0
    %191 = vmatpush1.bf16.msra.mxu0 0
    %192 = vmatprep.mubr.bf16.mxu0 0
    %193 = vmatmul.mubr.bf16.gmra.mrb[0].mxu0 %v78
    %v194 = vpop.f32.mrb[0].mxu0
    %v195 = vadd.f32 0.0, %v194
    %v196 = vpop.f32.mrb[0].mxu0
    %v197 = vadd.f32 0.0, %v196
    %v198 = vpop.f32.mrb[0].mxu0
    %v199 = vadd.f32 0.0, %v198
    %v200 = vpop.f32.mrb[0].mxu0
    %v201 = vadd.f32 0.0, %v200
    %202 = vdwg.mxu0
    %v203 = vadd.f32 %v52, %v195
    %v204 = vadd.f32 %v53, %v197
    %v205 = vadd.f32 %v54, %v199
    %v206 = vadd.f32 %v55, %v201
    %207 = vst [vmem:[#allocation2] sm:$0xff] %v203
    %208 = vst [vmem:[#allocation2 + $0x8] sm:$0xff] %v204
    %209 = vst [vmem:[#allocation2 + $0x10] sm:$0xff] %v205
    %210 = vst [vmem:[#allocation2 + $0x18] sm:$0xff] %v206
    // Predicated region
    $region22: #{decoder_forward.5} parent=1 // pred_check
      %p211 = pneg %p44
    $region23: #{decoder_forward.5} parent=1 // pred_check_branch
      %213 = sbr.rel (%p211) target = $region25
    $region24: #{decoder_forward.5} parent=1 // pred_region
      %v214 = vld [vmem:[#allocation2] sm:$0xff]
      %v215 = vld [vmem:[#allocation2 + $0x8] sm:$0xff]
      %v216 = vld [vmem:[#allocation2 + $0x10] sm:$0xff]
      %v217 = vld [vmem:[#allocation2 + $0x18] sm:$0xff]
      %218 = vst [vmem:[#allocation8] sm:$0xff] %v214
      %219 = vst [vmem:[#allocation8 + $0x8] sm:$0xff] %v215
      %220 = vst [vmem:[#allocation8 + $0x10] sm:$0xff] %v216
      %221 = vst [vmem:[#allocation8 + $0x18] sm:$0xff] %v217
      %v222 = vadd.f32 %v214, %v216
      %v223 = vrot.slane %v222, 4
      %v224 = vadd.f32 %v222, %v223
      %v225 = vrot.slane %v224, 2
      %v226 = vadd.f32 %v224, %v225
      %v227 = vrot.slane %v226, 1
      %v228 = vadd.f32 %v226, %v227
      %v229 = vadd.f32 %v215, %v217
      %v230 = vrot.slane %v229, 4
      %v231 = vadd.f32 %v229, %v230
      %v232 = vrot.slane %v231, 2
      %v233 = vadd.f32 %v231, %v232
      %v234 = vrot.slane %v233, 1
      %v235 = vadd.f32 %v233, %v234
      %v236 = vmul.f32 %v214, %v214
      %v237 = vmul.f32 %v215, %v215
      %v238 = vmul.f32 %v216, %v216
      %v239 = vmul.f32 %v217, %v217
      %v240 = vadd.f32 %v236, %v238
      %v241 = vrot.slane %v240, 4
      %v242 = vadd.f32 %v240, %v241
      %v243 = vrot.slane %v242, 2
      %v244 = vadd.f32 %v242, %v243
      %v245 = vrot.slane %v244, 1
      %v246 = vadd.f32 %v244, %v245
      %v247 = vadd.f32 %v237, %v239
      %v248 = vrot.slane %v247, 4
      %v249 = vadd.f32 %v247, %v248
      %v250 = vrot.slane %v249, 2
      %v251 = vadd.f32 %v249, %v250
      %v252 = vrot.slane %v251, 1
      %v253 = vadd.f32 %v251, %v252
      %vm254 = vcmask 1040384
      %v255 = vsel %vm254, %v228, %v246
      %v256 = vsel %vm254, %v235, %v253
      %vm257 = vcmask 1041408
      %v258 = vsel %vm257, %v255, 0.0
      %v259 = vsel %vm257, %v256, 0.0
      %260 = vst [vmem:[#allocation9] sm:$0xff] %v258
      %261 = vst [vmem:[#allocation9 + $0x8] sm:$0xff] %v259
    $region25: #{decoder_forward.5} parent=1 // pred_fallthru
      _
    // Predicated region
    $region26: #{decoder_forward.5} parent=1 // pred_check
      _
    $region27: #{decoder_forward.5} parent=1 // pred_check_branch
      %263 = sbr.rel (0) target = $region29
    $region28: #{decoder_forward.5} parent=1 // pred_region
      %s265 = ssub.s32 512, 512
      %266 = vsyncadd [#allocation5], %s265
      %s267 = sshll.u32 [#allocation8], 4
      %s268 = int_to_ptr.vmem [resolvable:$true] %s267
      %273 = dma.vmem_to_hbm [thread:$0]  %s268, 512, %s2, [#allocation5], 256, 256, 16
    $region29: #{decoder_forward.5} parent=1 // pred_fallthru
      _
    // Predicated region
    $region30: #{decoder_forward.5} parent=1 // pred_check
      _
    $region31: #{decoder_forward.5} parent=1 // pred_check_branch
      %275 = sbr.rel (0) target = $region33
    $region32: #{decoder_forward.5} parent=1 // pred_region
      %s277 = ssub.s32 256, 256
      %278 = vsyncadd [#allocation10], %s277
      %s280 = sshll.u32 [#allocation9], 4
      %s281 = int_to_ptr.vmem [resolvable:$true] %s280
      %283 = dma.vmem_to_hbm [thread:$0]  %s281, 256, %s3, [#allocation10]
    $region33: #{decoder_forward.5} parent=1 // pred_fallthru
      _
    // Predicated region
    $region34: #{decoder_forward.5} parent=1 // pred_check
      _
    $region35: #{decoder_forward.5} parent=1 // pred_check_branch
      %285 = sbr.rel (0) target = $region37
    $region36: #{decoder_forward.5} parent=1 // pred_region
      %286 = dma.done [#allocation5], 512
    $region37: #{decoder_forward.5} parent=1 // pred_fallthru
      _
    // Predicated region
    $region38: #{decoder_forward.5} parent=1 // pred_check
      _
    $region39: #{decoder_forward.5} parent=1 // pred_check_branch
      %288 = sbr.rel (0) target = $region41
    $region40: #{decoder_forward.5} parent=1 // pred_region
      %289 = dma.done [#allocation10], 256
    $region41: #{decoder_forward.5} parent=1 // pred_fallthru
      _
    %290 = vsyncpa [#allocation4], 1
    %291 = vsyncpa [#allocation7], 1
    %292 = vsyncpa [#allocation5], 1
    %293 = vsyncpa [#allocation10], 1

// kernel: decoder_forward.8
$region0: #{decoder_forward.8}
  #allocation0 [shape = 'u32[]', space=smem, size = 0x4, offset = 0x4, fixed_abs, tag = 'smem constant byte address 0x4 - core index']
  #allocation1 [shape = 'u32[144,128]{1,0:T(1,128)}', space=vmem, size = 0x12000, scoped, tag = 'internal scratch']
  %s0 = inlined_call_operand.hbm [shape: f32[4,32,128], index: 0, kind: input, shape index: {}]
  %s1 = inlined_call_operand.vmem [shape: f32[1,128], index: 1, kind: input, shape index: {}]
  %s2 = inlined_call_operand.vmem [shape: f32[1,128], index: 2, kind: input, shape index: {}]
  %s3 = inlined_call_operand.vmem [shape: bf16[4,32,128], index: 3, kind: output, shape index: {}]
  %s4 = sld [smem:[#allocation0]]
  $region49: #{decoder_forward.8} parent=0
    _
  %s6 = ssub.s32 1, %s4
  %s7 = scalar_select 0, %s6, %s4
  $region1: #{decoder_forward.8} parent=0
    #allocation2 [shape = 'u8[32768]{0}', space=vmem, size = 0x8000, scoped, tag = 'input window, operand 0']
    #allocation3 [shape = 's32[2]{0}', space=sflag, size = 0x8, scoped, tag = 'scoped memory for decoder_forward.8']
    %8 = vsyncpa [#allocation3], 0
    %s9 = scalar_lea.sflag [#allocation3], 1
    %10 = vsyncpa %s9, 0
    loop: start=0, step=1, limit=6
    $region2: #{decoder_forward.8} parent=1 // loop_pre_header
      _
    $region3: #{decoder_forward.8} parent=1 // loop_header
      %s12 = sphi 0, %s16
      %p13 = scmp.ge.s32.totalorder %s12, 6
      %s19 = sphi 0, %s38
      %s20 = sphi 0, %s34
      %s21 = sphi 0, %s30
      %s22 = sphi 0, %s19
      %s23 = sphi 0, %s20
      %s24 = sphi 0, %s21
      %s25 = sphi 0, %s22
      %s26 = sphi 0, %s23
      %s27 = sphi 0, %s24
      %s45 = sphi 0, %s47
      %s48 = sphi 0, %s45
      %s49 = sphi 0, %s48
      %s65 = sphi 0, %s49
      %s71 = sphi 0, %s73
      %s74 = sphi 0, %s71
      %s75 = sphi 0, %s74
      %s91 = sphi 0, %s75
      %s97 = sphi 0, %s99
      %s100 = sphi 0, %s97
      %s101 = sphi 0, %s100
      %s117 = sphi 0, %s101
      %s127 = sphi 0, %s129
      %s130 = sphi 0, %s127
      %s131 = sphi 0, %s130
      %s147 = sphi 0, %s131
    $region4: #{decoder_forward.8} parent=1 // loop_header_branch
      %15 = sbr.rel (%p13) target = $region8
    $region5: #{decoder_forward.8} parent=1 // loop_body
      %s17 = ssub.s32 %s12, 1
      %s18 = ssub.s32 %s12, 2
      %s28 = sadd.s32 1, %s21
      %p29 = scmp.ge.s32.totalorder %s28, 1
      %s30 = scalar_select %p29, 0, %s28
      %s31 = sadd.s32 1, %s20
      %s32 = scalar_select %p29, %s31, %s20
      %p33 = scmp.ge.s32.totalorder %s32, 1
      %s34 = scalar_select %p33, 0, %s32
      %s35 = sadd.s32 1, %s19
      %s36 = scalar_select %p33, %s35, %s19
      %p37 = scmp.ge.s32.totalorder %s36, 4
      %s38 = scalar_select %p37, 0, %s36
      %s39 = ssub.s32 %s19, %s38
      %s40 = ssub.s32 %s20, %s34
      %s41 = sor.u32 %s39, %s40
      %s42 = ssub.s32 %s21, %s30
      %s43 = sor.u32 %s41, %s42
      %p44 = scmp.eq.s32.totalorder %s43, 0
      %s46 = sadd.s32 %s45, 1
      %s47 = scalar_select %p44, %s45, %s46
      %p50 = pneg %p44
      %p51 = scmp.eq.s32.totalorder %s12, 3
      %p52 = por %p50, %p51
      %p53 = scmp.ne.s32.totalorder %s45, %s48
      %p54 = scmp.eq.s32.totalorder %s12, 0
      %p55 = por %p53, %p54
      %p56 = scmp.ne.s32.totalorder %s45, %s48
      %p57 = scmp.eq.s32.totalorder %s17, 3
      %p58 = por %p56, %p57
      %p59 = scmp.ne.s32.totalorder %s48, %s49
      %p60 = scmp.eq.s32.totalorder %s17, 0
      %p61 = por %p59, %p60
      %p62 = scmp.ne.s32.totalorder %s48, %s49
      %p63 = scmp.eq.s32.totalorder %s18, 3
      %p64 = por %p62, %p63
      %p66 = scmp.ne.s32.totalorder %s49, %s65
      %p67 = scmp.eq.s32.totalorder %s18, 0
      %p68 = por %p66, %p67
      %s69 = ssub.s32 %s21, %s30
      %p70 = scmp.eq.s32.totalorder %s69, 0
      %s72 = sadd.s32 %s71, 1
      %s73 = scalar_select %p70, %s71, %s72
      %p76 = pneg %p70
      %p77 = scmp.eq.s32.totalorder %s12, 3
      %p78 = por %p76, %p77
      %p79 = scmp.ne.s32.totalorder %s71, %s74
      %p80 = scmp.eq.s32.totalorder %s12, 0
      %p81 = por %p79, %p80
      %p82 = scmp.ne.s32.totalorder %s71, %s74
      %p83 = scmp.eq.s32.totalorder %s17, 3
      %p84 = por %p82, %p83
      %p85 = scmp.ne.s32.totalorder %s74, %s75
      %p86 = scmp.eq.s32.totalorder %s17, 0
      %p87 = por %p85, %p86
      %p88 = scmp.ne.s32.totalorder %s74, %s75
      %p89 = scmp.eq.s32.totalorder %s18, 3
      %p90 = por %p88, %p89
      %p92 = scmp.ne.s32.totalorder %s75, %s91
      %p93 = scmp.eq.s32.totalorder %s18, 0
      %p94 = por %p92, %p93
      %s95 = ssub.s32 %s21, %s30
      %p96 = scmp.eq.s32.totalorder %s95, 0
      %s98 = sadd.s32 %s97, 1
      %s99 = scalar_select %p96, %s97, %s98
      %p102 = pneg %p96
      %p103 = scmp.eq.s32.totalorder %s12, 3
      %p104 = por %p102, %p103
      %p105 = scmp.ne.s32.totalorder %s97, %s100
      %p106 = scmp.eq.s32.totalorder %s12, 0
      %p107 = por %p105, %p106
      %p108 = scmp.ne.s32.totalorder %s97, %s100
      %p109 = scmp.eq.s32.totalorder %s17, 3
      %p110 = por %p108, %p109
      %p111 = scmp.ne.s32.totalorder %s100, %s101
      %p112 = scmp.eq.s32.totalorder %s17, 0
      %p113 = por %p111, %p112
      %p114 = scmp.ne.s32.totalorder %s100, %s101
      %p115 = scmp.eq.s32.totalorder %s18, 3
      %p116 = por %p114, %p115
      %p118 = scmp.ne.s32.totalorder %s101, %s117
      %p119 = scmp.eq.s32.totalorder %s18, 0
      %p120 = por %p118, %p119
      %s121 = ssub.s32 %s19, %s38
      %s122 = ssub.s32 %s20, %s34
      %s123 = sor.u32 %s121, %s122
      %s124 = ssub.s32 %s21, %s30
      %s125 = sor.u32 %s123, %s124
      %p126 = scmp.eq.s32.totalorder %s125, 0
      %s128 = sadd.s32 %s127, 1
      %s129 = scalar_select %p126, %s127, %s128
      %p132 = pneg %p126
      %p133 = scmp.eq.s32.totalorder %s12, 3
      %p134 = por %p132, %p133
      %p135 = scmp.ne.s32.totalorder %s127, %s130
      %p136 = scmp.eq.s32.totalorder %s12, 0
      %p137 = por %p135, %p136
      %p138 = scmp.ne.s32.totalorder %s127, %s130
      %p139 = scmp.eq.s32.totalorder %s17, 3
      %p140 = por %p138, %p139
      %p141 = scmp.ne.s32.totalorder %s130, %s131
      %p142 = scmp.eq.s32.totalorder %s17, 0
      %p143 = por %p141, %p142
      %p144 = scmp.ne.s32.totalorder %s130, %s131
      %p145 = scmp.eq.s32.totalorder %s18, 3
      %p146 = por %p144, %p145
      %p148 = scmp.ne.s32.totalorder %s131, %s147
      %p149 = scmp.eq.s32.totalorder %s18, 0
      %p150 = por %p148, %p149
      %p151 = scmp.le.s32.totalorder 1, %s12
      %p152 = scmp.lt.s32.totalorder %s12, 5
      %p153 = pnand %p151, %p152
      %p154 = pneg %p153
      // Predicated region
      $region9: #{decoder_forward.8} parent=5 // pred_check
        _
      $region10: #{decoder_forward.8} parent=5 // pred_check_branch
        %156 = sbr.rel (%p153) target = $region12
      $region11: #{decoder_forward.8} parent=5 // pred_region
        %s157 = ssub.s32 %s12, 1
        // Predicated region
        $region13: #{decoder_forward.8} parent=11 // pred_check
          %p158 = pneg %p87
        $region14: #{decoder_forward.8} parent=11 // pred_check_branch
          %160 = sbr.rel (%p158) target = $region16
        $region15: #{decoder_forward.8} parent=11 // pred_region
          %p161 = scmp.lt.s32.totalorder %s24, 0
          %s162 = scalar_select %p161, %s24, 0
          %s163 = scalar_lea.vmem %s1, %s162
        $region16: #{decoder_forward.8} parent=11 // pred_fallthru
          _
        // Predicated region
        $region17: #{decoder_forward.8} parent=11 // pred_check
          %p164 = pneg %p113
        $region18: #{decoder_forward.8} parent=11 // pred_check_branch
          %166 = sbr.rel (%p164) target = $region20
        $region19: #{decoder_forward.8} parent=11 // pred_region
          %p167 = scmp.lt.s32.totalorder %s24, 0
          %s168 = scalar_select %p167, %s24, 0
          %s169 = scalar_lea.vmem %s2, %s168
        $region20: #{decoder_forward.8} parent=11 // pred_fallthru
          _
      $region12: #{decoder_forward.8} parent=5 // pred_fallthru
        _
      %p170 = scmp.lt.s32.totalorder %s12, 4
      // Predicated region
      $region21: #{decoder_forward.8} parent=5 // pred_check
        %p171 = pneg %p170
      $region22: #{decoder_forward.8} parent=5 // pred_check_branch
        %173 = sbr.rel (%p171) target = $region24
      $region23: #{decoder_forward.8} parent=5 // pred_region
        // Predicated region
        $region25: #{decoder_forward.8} parent=23 // pred_check
          %p174 = pneg %p55
        $region26: #{decoder_forward.8} parent=23 // pred_check_branch
          %176 = sbr.rel (%p174) target = $region28
        $region27: #{decoder_forward.8} parent=23 // pred_region
          %s177 = sand.u32 %s45, 1
          %s178 = scalar_lea.sflag [#allocation3], %s177
          %s179 = sand.u32 %s45, 1
          %s180 = smul.addr %s179, 32
          %s181 = scalar_lea.vmem [#allocation2], %s180
          %s182 = smul.u32 4, %s20
          %s184 = ssub.s32 512, 512
          %185 = vsyncadd %s178, %s184
          %s186 = sadd.s32 %s21, %s182
          %s187 = smul.addr %s19, 4
          %s188 = sadd.s32 %s186, %s187
          %s189 = smul.addr %s188, 128
          %s190 = scalar_lea.hbm %s0, %s189
          %s191 = sshll.u32 %s181, 4
          %s192 = int_to_ptr.vmem [resolvable:$true] %s191
          %197 = dma.hbm_to_vmem [thread:$0]  %s190, 512, %s192, %s178, 128, 128, 8
        $region28: #{decoder_forward.8} parent=23 // pred_fallthru
          _
      $region24: #{decoder_forward.8} parent=5 // pred_fallthru
        _
      %p198 = scmp.le.s32.totalorder 1, %s12
      %p199 = scmp.lt.s32.totalorder %s12, 5
      %p200 = pnand %p198, %p199
      %p201 = pneg %p200
      // Predicated region
      $region29: #{decoder_forward.8} parent=5 // pred_check
        _
      $region30: #{decoder_forward.8} parent=5 // pred_check_branch
        %203 = sbr.rel (%p200) target = $region32
      $region31: #{decoder_forward.8} parent=5 // pred_region
        %s204 = ssub.s32 %s12, 1
        %s205 = sand.u32 %s48, 1
        %s206 = scalar_lea.sflag [#allocation3], %s205
        %s207 = sand.u32 %s48, 1
        %s208 = smul.addr %s207, 32
        %s209 = scalar_lea.vmem [#allocation2], %s208
        // Predicated region
        $region33: #{decoder_forward.8} parent=31 // pred_check
          %p210 = pneg %p61
        $region34: #{decoder_forward.8} parent=31 // pred_check_branch
          %212 = sbr.rel (%p210) target = $region36
        $region35: #{decoder_forward.8} parent=31 // pred_region
          %213 = dma.done %s206, 512
        $region36: #{decoder_forward.8} parent=31 // pred_fallthru
          _
        %s214 = sand.u32 %s48, 1
        %s215 = scalar_lea.sflag [#allocation3], %s214
        %s216 = sand.u32 %s48, 1
        %s217 = smul.addr %s216, 32
        %s218 = scalar_lea.vmem [#allocation2], %s217
        %p219 = pneg %p61
        %p220 = pneg %p58
        %p221 = scmp.lt.s32.totalorder %s24, 0
        %s222 = scalar_select %p221, %s24, 0
        %s223 = scalar_lea.vmem %s1, %s222
        %p224 = pneg %p87
        %p225 = pneg %p84
        %p226 = scmp.lt.s32.totalorder %s24, 0
        %s227 = scalar_select %p226, %s24, 0
        %s228 = scalar_lea.vmem %s2, %s227
        %p229 = pneg %p113
        %p230 = pneg %p110
        %p231 = pneg %p143
        %p232 = pneg %p140
        %s233 = smul.u32 4, %s23
        %p234 = scmp.lt.s32.totalorder %s22, 3
        %s235 = scalar_select %p234, %s22, 3
        %p236 = scmp.lt.s32.totalorder %s233, 3
        %s237 = scalar_select %p236, %s233, 3
        %p238 = scmp.lt.s32.totalorder %s24, 0
        %s239 = scalar_select %p238, %s24, 0
        %s240 = sadd.s32 %s239, %s237
        %s241 = smul.addr %s235, 4
        %s242 = sadd.s32 %s240, %s241
        %s243 = smul.addr %s242, 4
        %s244 = scalar_lea.vmem %s3, %s243
        %s245 = smul.u32 4, %s23
        %p246 = scmp.lt.s32.totalorder %s24, 0
        %s247 = scalar_select %p246, %s24, 0
        %s248 = scalar_lea.vmem %s1, %s247
        %p249 = scmp.lt.s32.totalorder %s24, 0
        %s250 = scalar_select %p249, %s24, 0
        %s251 = scalar_lea.vmem %s2, %s250
        %s252 = smul.u32 4, %s23
        %p253 = scmp.lt.s32.totalorder %s22, 3
        %s254 = scalar_select %p253, %s22, 3
        %p255 = scmp.lt.s32.totalorder %s252, 3
        %s256 = scalar_select %p255, %s252, 3
        %p257 = scmp.lt.s32.totalorder %s24, 0
        %s258 = scalar_select %p257, %s24, 0
        %s259 = sadd.s32 %s258, %s256
        %s260 = smul.addr %s254, 4
        %s261 = sadd.s32 %s259, %s260
        %s262 = smul.addr %s261, 4
        %s263 = scalar_lea.vmem %s3, %s262
        %s264 = smul.u32 4, %s23
        %v265 = vld [vmem:[%s209] sm:$0xff]
        %v266 = vld [vmem:[%s209 + $0x8] sm:$0xff]
        %v267 = vld [vmem:[%s209 + $0x10] sm:$0xff]
        %v268 = vld [vmem:[%s209 + $0x18] sm:$0xff]
        %v269 = vld [vmem:[%s248] sm:$0x1]
        %v271 = vlaneseq
        %v272 = vshrl.u32 %v271, 7
        %v273 = vsub.s32 0, %v272
        %v274 = vrot.slane %v269, %v273
        %v276 = vmul.f32 %v265, %v274
        %v277 = vmul.f32 %v266, %v274
        %v278 = vmul.f32 %v267, %v274
        %v279 = vmul.f32 %v268, %v274
        %v280 = vld [vmem:[%s251] sm:$0x1]
        %v282 = vlaneseq
        %v283 = vshrl.u32 %v282, 7
        %v284 = vsub.s32 0, %v283
        %v285 = vrot.slane %v280, %v284
        %v287 = vadd.f32 %v276, %v285
        %v288 = vadd.f32 %v277, %v285
        %v289 = vadd.f32 %v278, %v285
        %v290 = vadd.f32 %v279, %v285
        %v291 = vmax.f32 %v287, 0.0
        %v292 = vmax.f32 %v288, 0.0
        %v293 = vmax.f32 %v289, 0.0
        %v294 = vmax.f32 %v290, 0.0
        %v295 = vpack.c.bf16 %v292, %v291
        %v296 = vpack.c.bf16 %v294, %v293
        %v299 = vunpack.c.l.b16 %v295
        %v300 = vunpack.c.h.b16 %v295
        %v301 = vunpack.c.l.b16 %v296
        %v302 = vunpack.c.h.b16 %v296
        %v303 = vpack.c.b16 %v299, %v299
        %v304 = vpack.c.b16 %v300, %v300
        %v305 = vpack.c.b16 %v301, %v301
        %v306 = vpack.c.b16 %v302, %v302
        %311 = vst [vmem:[%s263] sm:$0xf] %v303
        %312 = vst [vmem:[%s263 + $0x4] sm:$0xf] %v304
        %313 = vst [vmem:[%s263 + $0x8] sm:$0xf] %v305
        %314 = vst [vmem:[%s263 + $0xc] sm:$0xf] %v306
        %s315 = smul.u32 4, %s23
        %p316 = scmp.lt.s32.totalorder %s22, 3
        %s317 = scalar_select %p316, %s22, 3
        %p318 = scmp.lt.s32.totalorder %s315, 3
        %s319 = scalar_select %p318, %s315, 3
        %p320 = scmp.lt.s32.totalorder %s24, 0
        %s321 = scalar_select %p320, %s24, 0
        %s322 = sadd.s32 %s321, %s319
        %s323 = smul.addr %s317, 4
        %s324 = sadd.s32 %s322, %s323
        %s325 = smul.addr %s324, 4
        %s326 = scalar_lea.vmem %s3, %s325
        // Predicated region
        $region37: #{decoder_forward.8} parent=31 // pred_check
          %p327 = pneg %p140
        $region38: #{decoder_forward.8} parent=31 // pred_check_branch
          %329 = sbr.rel (%p327) target = $region40
        $region39: #{decoder_forward.8} parent=31 // pred_region
          %s330 = smul.u32 4, %s23
        $region40: #{decoder_forward.8} parent=31 // pred_fallthru
          _
      $region32: #{decoder_forward.8} parent=5 // pred_fallthru
        _
      %p331 = scmp.le.s32.totalorder 2, %s12
      // Predicated region
      $region41: #{decoder_forward.8} parent=5 // pred_check
        %p332 = pneg %p331
      $region42: #{decoder_forward.8} parent=5 // pred_check_branch
        %334 = sbr.rel (%p332) target = $region44
      $region43: #{decoder_forward.8} parent=5 // pred_region
        %s335 = ssub.s32 %s12, 2
        // Predicated region
        $region45: #{decoder_forward.8} parent=43 // pred_check
          %p336 = pneg %p146
        $region46: #{decoder_forward.8} parent=43 // pred_check_branch
          %338 = sbr.rel (%p336) target = $region48
        $region47: #{decoder_forward.8} parent=43 // pred_region
          %s339 = smul.u32 4, %s26
          %p340 = scmp.lt.s32.totalorder %s25, 3
          %s341 = scalar_select %p340, %s25, 3
          %p342 = scmp.lt.s32.totalorder %s339, 3
          %s343 = scalar_select %p342, %s339, 3
          %p344 = scmp.lt.s32.totalorder %s27, 0
          %s345 = scalar_select %p344, %s27, 0
          %s346 = sadd.s32 %s345, %s343
          %s347 = smul.addr %s341, 4
          %s348 = sadd.s32 %s346, %s347
          %s349 = smul.addr %s348, 4
          %s350 = scalar_lea.vmem %s3, %s349
        $region48: #{decoder_forward.8} parent=43 // pred_fallthru
          _
      $region44: #{decoder_forward.8} parent=5 // pred_fallthru
        _
    $region6: #{decoder_forward.8} parent=1 // loop_footer
      %s16 = sadd.s32 1, %s12
    $region7: #{decoder_forward.8} parent=1 // loop_footer_branch
      %11 = sbr.rel target = $region3
    $region8: #{decoder_forward.8} parent=1 // loop_exit
      _
    %351 = vsyncpa [#allocation3], 1
    %s352 = scalar_lea.sflag [#allocation3], 1
    %353 = vsyncpa %s352, 1

// kernel: decoder_forward.7
$region0: #{decoder_forward.7}
  #allocation0 [shape = 'u32[]', space=smem, size = 0x4, offset = 0x4, fixed_abs, tag = 'smem constant byte address 0x4 - core index']
  #allocation1 [shape = 'u32[144,128]{1,0:T(1,128)}', space=vmem, size = 0x12000, scoped, tag = 'internal scratch']
  #allocation2 [shape = 'f32[32,128]{1,0:T(8,128)}', space=vmem, size = 0x4000, scoped, tag = 'scratch operand']
  %s0 = inlined_call_operand.hbm [shape: bf16[4,32,128], index: 0, kind: input, shape index: {}]
  %s1 = inlined_call_operand.hbm [shape: bf16[4,128,128], index: 1, kind: input, shape index: {}]
  %s2 = inlined_call_operand.hbm [shape: f32[4,32,128], index: 2, kind: output, shape index: {0}]
  %s3 = inlined_call_operand.hbm [shape: f32[4,8,128], index: 3, kind: output, shape index: {1}]
  %4 = xla_tuple %s2, %s3
  %s5 = sld [smem:[#allocation0]]
  $region65: #{decoder_forward.7} parent=0
    _
  %s7 = ssub.s32 1, %s5
  %s8 = scalar_select 0, %s7, %s5
  $region1: #{decoder_forward.7} parent=0
    #allocation3 [shape = 'u8[16384]{0}', space=vmem, size = 0x4000, scoped, tag = 'input window, operand 0']
    #allocation4 [shape = 's32[2]{0}', space=sflag, size = 0x8, scoped, tag = 'scoped memory for decoder_forward.7']
    #allocation5 [shape = 's32[2]{0}', space=sflag, size = 0x8, scoped, tag = 'scoped memory for decoder_forward.7']
    #allocation6 [shape = 'u8[65536]{0}', space=vmem, size = 0x10000, scoped, tag = 'input window, operand 1']
    #allocation7 [shape = 's32[2]{0}', space=sflag, size = 0x8, scoped, tag = 'scoped memory for decoder_forward.7']
    #allocation8 [shape = 'u8[32768]{0}', space=vmem, size = 0x8000, scoped, tag = 'output window, operand 0']
    #allocation9 [shape = 'u8[8192]{0}', space=vmem, size = 0x2000, scoped, tag = 'output window, operand 1']
    #allocation10 [shape = 's32[2]{0}', space=sflag, size = 0x8, scoped, tag = 'scoped memory for decoder_forward.7']
    %9 = vsyncpa [#allocation4], 0
    %s10 = scalar_lea.sflag [#allocation4], 1
    %11 = vsyncpa %s10, 0
    %12 = vsyncpa [#allocation7], 0
    %s13 = scalar_lea.sflag [#allocation7], 1
    %14 = vsyncpa %s13, 0
    %15 = vsyncpa [#allocation5], 0
    %s16 = scalar_lea.sflag [#allocation5], 1
    %17 = vsyncpa %s16, 0
    %18 = vsyncpa [#allocation10], 0
    %s19 = scalar_lea.sflag [#allocation10], 1
    %20 = vsyncpa %s19, 0
    loop: start=0, step=1, limit=6
    $region2: #{decoder_forward.7} parent=1 // loop_pre_header
      _
    $region3: #{decoder_forward.7} parent=1 // loop_header
      %s22 = sphi 0, %s26
      %p23 = scmp.ge.s32.totalorder %s22, 6
      %s29 = sphi 0, %s55
      %s30 = sphi 0, %s51
      %s31 = sphi 0, %s47
      %s32 = sphi 0, %s43
      %s33 = sphi 0, %s29
      %s34 = sphi 0, %s30
      %s35 = sphi 0, %s31
      %s36 = sphi 0, %s32
      %s37 = sphi 0, %s33
      %s38 = sphi 0, %s34
      %s39 = sphi 0, %s35
      %s40 = sphi 0, %s36
      %s62 = sphi 0, %s64
      %s65 = sphi 0, %s62
      %s66 = sphi 0, %s65
      %s82 = sphi 0, %s66
      %s92 = sphi 0, %s94
      %s95 = sphi 0, %s92
      %s96 = sphi 0, %s95
      %s112 = sphi 0, %s96
      %s122 = sphi 0, %s124
      %s125 = sphi 0, %s122
      %s126 = sphi 0, %s125
      %s142 = sphi 0, %s126
      %s152 = sphi 0, %s154
      %s155 = sphi 0, %s152
      %s156 = sphi 0, %s155
      %s172 = sphi 0, %s156
    $region4: #{decoder_forward.7} parent=1 // loop_header_branch
      %25 = sbr.rel (%p23) target = $region8
    $region5: #{decoder_forward.7} parent=1 // loop_body
      %s27 = ssub.s32 %s22, 1
      %s28 = ssub.s32 %s22, 2
      %s41 = sadd.s32 1, %s32
      %p42 = scmp.ge.s32.totalorder %s41, 1
      %s43 = scalar_select %p42, 0, %s41
      %s44 = sadd.s32 1, %s31
      %s45 = scalar_select %p42, %s44, %s31
      %p46 = scmp.ge.s32.totalorder %s45, 1
      %s47 = scalar_select %p46, 0, %s45
      %s48 = sadd.s32 1, %s30
      %s49 = scalar_select %p46, %s48, %s30
      %p50 = scmp.ge.s32.totalorder %s49, 1
      %s51 = scalar_select %p50, 0, %s49
      %s52 = sadd.s32 1, %s29
      %s53 = scalar_select %p50, %s52, %s29
      %p54 = scmp.ge.s32.totalorder %s53, 4
      %s55 = scalar_select %p54, 0, %s53
      %s56 = ssub.s32 %s29, %s55
      %s57 = ssub.s32 %s30, %s51
      %s58 = sor.u32 %s56, %s57
      %s59 = ssub.s32 %s32, %s43
      %s60 = sor.u32 %s58, %s59
      %p61 = scmp.eq.s32.totalorder %s60, 0
      %s63 = sadd.s32 %s62, 1
      %s64 = scalar_select %p61, %s62, %s63
      %p67 = pneg %p61
      %p68 = scmp.eq.s32.totalorder %s22, 3
      %p69 = por %p67, %p68
      %p70 = scmp.ne.s32.totalorder %s62, %s65
      %p71 = scmp.eq.s32.totalorder %s22, 0
      %p72 = por %p70, %p71
      %p73 = scmp.ne.s32.totalorder %s62, %s65
      %p74 = scmp.eq.s32.totalorder %s27, 3
      %p75 = por %p73, %p74
      %p76 = scmp.ne.s32.totalorder %s65, %s66
      %p77 = scmp.eq.s32.totalorder %s27, 0
      %p78 = por %p76, %p77
      %p79 = scmp.ne.s32.totalorder %s65, %s66
      %p80 = scmp.eq.s32.totalorder %s28, 3
      %p81 = por %p79, %p80
      %p83 = scmp.ne.s32.totalorder %s66, %s82
      %p84 = scmp.eq.s32.totalorder %s28, 0
      %p85 = por %p83, %p84
      %s86 = ssub.s32 %s29, %s55
      %s87 = ssub.s32 %s32, %s43
      %s88 = sor.u32 %s86, %s87
      %s89 = ssub.s32 %s31, %s47
      %s90 = sor.u32 %s88, %s89
      %p91 = scmp.eq.s32.totalorder %s90, 0
      %s93 = sadd.s32 %s92, 1
      %s94 = scalar_select %p91, %s92, %s93
      %p97 = pneg %p91
      %p98 = scmp.eq.s32.totalorder %s22, 3
      %p99 = por %p97, %p98
      %p100 = scmp.ne.s32.totalorder %s92, %s95
      %p101 = scmp.eq.s32.totalorder %s22, 0
      %p102 = por %p100, %p101
      %p103 = scmp.ne.s32.totalorder %s92, %s95
      %p104 = scmp.eq.s32.totalorder %s27, 3
      %p105 = por %p103, %p104
      %p106 = scmp.ne.s32.totalorder %s95, %s96
      %p107 = scmp.eq.s32.totalorder %s27, 0
      %p108 = por %p106, %p107
      %p109 = scmp.ne.s32.totalorder %s95, %s96
      %p110 = scmp.eq.s32.totalorder %s28, 3
      %p111 = por %p109, %p110
      %p113 = scmp.ne.s32.totalorder %s96, %s112
      %p114 = scmp.eq.s32.totalorder %s28, 0
      %p115 = por %p113, %p114
      %s116 = ssub.s32 %s29, %s55
      %s117 = ssub.s32 %s30, %s51
      %s118 = sor.u32 %s116, %s117
      %s119 = ssub.s32 %s31, %s47
      %s120 = sor.u32 %s118, %s119
      %p121 = scmp.eq.s32.totalorder %s120, 0
      %s123 = sadd.s32 %s122, 1
      %s124 = scalar_select %p121, %s122, %s123
      %p127 = pneg %p121
      %p128 = scmp.eq.s32.totalorder %s22, 3
      %p129 = por %p127, %p128
      %p130 = scmp.ne.s32.totalorder %s122, %s125
      %p131 = scmp.eq.s32.totalorder %s22, 0
      %p132 = por %p130, %p131
      %p133 = scmp.ne.s32.totalorder %s122, %s125
      %p134 = scmp.eq.s32.totalorder %s27, 3
      %p135 = por %p133, %p134
      %p136 = scmp.ne.s32.totalorder %s125, %s126
      %p137 = scmp.eq.s32.totalorder %s27, 0
      %p138 = por %p136, %p137
      %p139 = scmp.ne.s32.totalorder %s125, %s126
      %p140 = scmp.eq.s32.totalorder %s28, 3
      %p141 = por %p139, %p140
      %p143 = scmp.ne.s32.totalorder %s126, %s142
      %p144 = scmp.eq.s32.totalorder %s28, 0
      %p145 = por %p143, %p144
      %s146 = ssub.s32 %s29, %s55
      %s147 = ssub.s32 %s30, %s51
      %s148 = sor.u32 %s146, %s147
      %s149 = ssub.s32 %s31, %s47
      %s150 = sor.u32 %s148, %s149
      %p151 = scmp.eq.s32.totalorder %s150, 0
      %s153 = sadd.s32 %s152, 1
      %s154 = scalar_select %p151, %s152, %s153
      %p157 = pneg %p151
      %p158 = scmp.eq.s32.totalorder %s22, 3
      %p159 = por %p157, %p158
      %p160 = scmp.ne.s32.totalorder %s152, %s155
      %p161 = scmp.eq.s32.totalorder %s22, 0
      %p162 = por %p160, %p161
      %p163 = scmp.ne.s32.totalorder %s152, %s155
      %p164 = scmp.eq.s32.totalorder %s27, 3
      %p165 = por %p163, %p164
      %p166 = scmp.ne.s32.totalorder %s155, %s156
      %p167 = scmp.eq.s32.totalorder %s27, 0
      %p168 = por %p166, %p167
      %p169 = scmp.ne.s32.totalorder %s155, %s156
      %p170 = scmp.eq.s32.totalorder %s28, 3
      %p171 = por %p169, %p170
      %p173 = scmp.ne.s32.totalorder %s156, %s172
      %p174 = scmp.eq.s32.totalorder %s28, 0
      %p175 = por %p173, %p174
      %p176 = scmp.le.s32.totalorder 1, %s22
      %p177 = scmp.lt.s32.totalorder %s22, 5
      %p178 = pnand %p176, %p177
      %p179 = pneg %p178
      // Predicated region
      $region9: #{decoder_forward.7} parent=5 // pred_check
        _
      $region10: #{decoder_forward.7} parent=5 // pred_check_branch
        %181 = sbr.rel (%p178) target = $region12
      $region11: #{decoder_forward.7} parent=5 // pred_region
        %s182 = ssub.s32 %s22, 1
      $region12: #{decoder_forward.7} parent=5 // pred_fallthru
        _
      %p183 = scmp.lt.s32.totalorder %s22, 4
      // Predicated region
      $region13: #{decoder_forward.7} parent=5 // pred_check
        %p184 = pneg %p183
      $region14: #{decoder_forward.7} parent=5 // pred_check_branch
        %186 = sbr.rel (%p184) target = $region16
      $region15: #{decoder_forward.7} parent=5 // pred_region
        // Predicated region
        $region17: #{decoder_forward.7} parent=15 // pred_check
          %p187 = pneg %p72
        $region18: #{decoder_forward.7} parent=15 // pred_check_branch
          %189 = sbr.rel (%p187) target = $region20
        $region19: #{decoder_forward.7} parent=15 // pred_region
          %s190 = sand.u32 %s62, 1
          %s191 = scalar_lea.sflag [#allocation4], %s190
          %s192 = sand.u32 %s62, 1
          %s193 = smul.addr %s192, 16
          %s194 = scalar_lea.vmem [#allocation3], %s193
          %s195 = smul.u32 4, %s30
          %s197 = ssub.s32 256, 256
          %198 = vsyncadd %s191, %s197
          %s199 = sadd.s32 %s32, %s195
          %s200 = smul.addr %s29, 4
          %s201 = sadd.s32 %s199, %s200
          %s202 = smul.addr %s201, 64
          %s203 = scalar_lea.hbm %s0, %s202
          %s204 = sshll.u32 %s194, 4
          %s205 = int_to_ptr.vmem [resolvable:$true] %s204
          %210 = dma.hbm_to_vmem [thread:$0]  %s203, 256, %s205, %s191, 64, 64, 4
        $region20: #{decoder_forward.7} parent=15 // pred_fallthru
          _
        // Predicated region
        $region21: #{decoder_forward.7} parent=15 // pred_check
          %p211 = pneg %p102
        $region22: #{decoder_forward.7} parent=15 // pred_check_branch
          %213 = sbr.rel (%p211) target = $region24
        $region23: #{decoder_forward.7} parent=15 // pred_region
          %s214 = sand.u32 %s92, 1
          %s215 = scalar_lea.sflag [#allocation7], %s214
          %s216 = sand.u32 %s92, 1
          %s217 = smul.addr %s216, 64
          %s218 = scalar_lea.vmem [#allocation6], %s217
          %s219 = smul.u32 16, %s32
          %s221 = ssub.s32 1024, 1024
          %222 = vsyncadd %s215, %s221
          %s223 = sadd.s32 %s31, %s219
          %s224 = smul.addr %s29, 16
          %s225 = sadd.s32 %s223, %s224
          %s226 = smul.addr %s225, 64
          %s227 = scalar_lea.hbm %s1, %s226
          %s228 = sshll.u32 %s218, 4
          %s229 = int_to_ptr.vmem [resolvable:$true] %s228
          %234 = dma.hbm_to_vmem [thread:$0]  %s227, 1024, %s229, %s215, 64, 64, 4
        $region24: #{decoder_forward.7} parent=15 // pred_fallthru
          _
      $region16: #{decoder_forward.7} parent=5 // pred_fallthru
        _
      %p235 = scmp.le.s32.totalorder 1, %s22
      %p236 = scmp.lt.s32.totalorder %s22, 5
      %p237 = pnand %p235, %p236
      %p238 = pneg %p237
      // Predicated region
      $region25: #{decoder_forward.7} parent=5 // pred_check
        _
      $region26: #{decoder_forward.7} parent=5 // pred_check_branch
        %240 = sbr.rel (%p237) target = $region28
      $region27: #{decoder_forward.7} parent=5 // pred_region
        %s241 = ssub.s32 %s22, 1
        %s242 = sand.u32 %s65, 1
        %s243 = scalar_lea.sflag [#allocation4], %s242
        %s244 = sand.u32 %s65, 1
        %s245 = smul.addr %s244, 16
        %s246 = scalar_lea.vmem [#allocation3], %s245
        // Predicated region
        $region29: #{decoder_forward.7} parent=27 // pred_check
          %p247 = pneg %p78
        $region30: #{decoder_forward.7} parent=27 // pred_check_branch
          %249 = sbr.rel (%p247) target = $region32
        $region31: #{decoder_forward.7} parent=27 // pred_region
          %250 = dma.done %s243, 256
        $region32: #{decoder_forward.7} parent=27 // pred_fallthru
          _
        %s251 = sand.u32 %s95, 1
        %s252 = scalar_lea.sflag [#allocation7], %s251
        %s253 = sand.u32 %s95, 1
        %s254 = smul.addr %s253, 64
        %s255 = scalar_lea.vmem [#allocation6], %s254
        // Predicated region
        $region33: #{decoder_forward.7} parent=27 // pred_check
          %p256 = pneg %p108
        $region34: #{decoder_forward.7} parent=27 // pred_check_branch
          %258 = sbr.rel (%p256) target = $region36
        $region35: #{decoder_forward.7} parent=27 // pred_region
          %259 = dma.done %s252, 1024
        $region36: #{decoder_forward.7} parent=27 // pred_fallthru
          _
        %s260 = sand.u32 %s65, 1
        %s261 = scalar_lea.sflag [#allocation4], %s260
        %s262 = sand.u32 %s65, 1
        %s263 = smul.addr %s262, 16
        %s264 = scalar_lea.vmem [#allocation3], %s263
        %p265 = pneg %p78
        %p266 = pneg %p75
        %s267 = sand.u32 %s95, 1
        %s268 = scalar_lea.sflag [#allocation7], %s267
        %s269 = sand.u32 %s95, 1
        %s270 = smul.addr %s269, 64
        %s271 = scalar_lea.vmem [#allocation6], %s270
        %p272 = pneg %p108
        %p273 = pneg %p105
        %p274 = pneg %p138
        %p275 = pneg %p135
        %s276 = sand.u32 %s125, 1
        %s277 = scalar_lea.sflag [#allocation5], %s276
        %s278 = sand.u32 %s125, 1
        %s279 = smul.addr %s278, 32
        %s280 = scalar_lea.vmem [#allocation8], %s279
        %p281 = pneg %p168
        %p282 = pneg %p165
        %s283 = sand.u32 %s155, 1
        %s284 = scalar_lea.sflag [#allocation10], %s283
        %s285 = sand.u32 %s155, 1
        %s286 = smul.addr %s285, 8
        %s287 = scalar_lea.vmem [#allocation9], %s286
        %s288 = smul.u32 4, %s34
        %s289 = smul.u32 16, %s36
        %s290 = smul.u32 4, %s34
        %p292 = scmp.eq.s32.totalorder %s36, 0
        // Predicated region
        $region37: #{decoder_forward.7} parent=27 // pred_check
          %p293 = pneg %p292
        $region38: #{decoder_forward.7} parent=27 // pred_check_branch
          %295 = sbr.rel (%p293) target = $region40
        $region39: #{decoder_forward.7} parent=27 // pred_region
          %296 = vst [vmem:[#allocation2] sm:$0xff] 0.0
          %297 = vst [vmem:[#allocation2 + $0x8] sm:$0xff] 0.0
          %298 = vst [vmem:[#allocation2 + $0x10] sm:$0xff] 0.0
          %299 = vst [vmem:[#allocation2 + $0x18] sm:$0xff] 0.0
        $region40: #{decoder_forward.7} parent=27 // pred_fallthru
          _
        %v300 = vld [vmem:[#allocation2] sm:$0xff]
        %v301 = vld [vmem:[#allocation2 + $0x8] sm:$0xff]
        %v302 = vld [vmem:[#allocation2 + $0x10] sm:$0xff]
        %v303 = vld [vmem:[#allocation2 + $0x18] sm:$0xff]
        %v304 = vld [vmem:[%s246] sm:$0xf]
        %v305 = vld [vmem:[%s246 + $0x4] sm:$0xf]
        %v306 = vld [vmem:[%s246 + $0x8] sm:$0xf]
        %v307 = vld [vmem:[%s246 + $0xc] sm:$0xf]
        %v308 = vld [vmem:[%s255] sm:$0xf]
        %v309 = vld [vmem:[%s255 + $0x4] sm:$0xf]
        %v310 = vld [vmem:[%s255 + $0x8] sm:$0xf]
        %v311 = vld [vmem:[%s255 + $0xc] sm:$0xf]
        %v312 = vld [vmem:[%s255 + $0x10] sm:$0xf]
        %v313 = vld [vmem:[%s255 + $0x14] sm:$0xf]
        %v314 = vld [vmem:[%s255 + $0x18] sm:$0xf]
        %v315 = vld [vmem:[%s255 + $0x1c] sm:$0xf]
        %v316 = vld [vmem:[%s255 + $0x20] sm:$0xf]
        %v317 = vld [vmem:[%s255 + $0x24] sm:$0xf]
        %v318 = vld [vmem:[%s255 + $0x28] sm:$0xf]
        %v319 = vld [vmem:[%s255 + $0x2c] sm:$0xf]
        %v320 = vld [vmem:[%s255 + $0x30] sm:$0xf]
        %v321 = vld [vmem:[%s255 + $0x34] sm:$0xf]
        %v322 = vld [vmem:[%s255 + $0x38] sm:$0xf]
        %v323 = vld [vmem:[%s255 + $0x3c] sm:$0xf]
        %v328 = vunpack.c.l.b16 %v304
        %v329 = vunpack.c.l.b16 %v305
        %v330 = vunpack.c.l.b16 %v306
        %v331 = vunpack.c.l.b16 %v307
        %v332 = vpack.c.b16 %v329, %v328
        %v333 = vpack.c.b16 %v331, %v330
        %v352 = vunpack.c.l.b16 %v308
        %v353 = vunpack.c.l.b16 %v309
        %v354 = vunpack.c.l.b16 %v310
        %v355 = vunpack.c.l.b16 %v311
        %v356 = vunpack.c.l.b16 %v312
        %v357 = vunpack.c.l.b16 %v313
        %v358 = vunpack.c.l.b16 %v314
        %v359 = vunpack.c.l.b16 %v315
        %v360 = vunpack.c.l.b16 %v316
        %v361 = vunpack.c.l.b16 %v317
        %v362 = vunpack.c.l.b16 %v318
        %v363 = vunpack.c.l.b16 %v319
        %v364 = vunpack.c.l.b16 %v320
        %v365 = vunpack.c.l.b16 %v321
        %v366 = vunpack.c.l.b16 %v322
        %v367 = vunpack.c.l.b16 %v323
        %v368 = vpack.c.b16 %v353, %v352
        %v369 = vpack.c.b16 %v355, %v354
        %v370 = vpack.c.b16 %v357, %v356
        %v371 = vpack.c.b16 %v359, %v358
        %v372 = vpack.c.b16 %v361, %v360
        %v373 = vpack.c.b16 %v363, %v362
        %v374 = vpack.c.b16 %v365, %v364
        %v375 = vpack.c.b16 %v367, %v366
        %384 = vmatprep.subr.bf16.mxu0 0
        %385 = vmatpush1.bf16.msra.mxu0 %v368
        %386 = vmatprep.subr.bf16.mxu0 0
        %387 = vmatpush1.bf16.msra.mxu0 %v369
        %388 = vmatprep.subr.bf16.mxu0 0
        %389 = vmatpush1.bf16.msra.mxu0 %v370
        %390 = vmatprep.subr.bf16.mxu0 0
        %391 = vmatpush1.bf16.msra.mxu0 %v371
        %392 = vmatprep.subr.bf16.mxu0 0
        %393 = vmatpush1.bf16.msra.mxu0 %v372
        %394 = vmatprep.subr.bf16.mxu0 0
        %395 = vmatpush1.bf16.msra.mxu0 %v373
        %396 = vmatprep.subr.bf16.mxu0 0
        %397 = vmatpush1.bf16.msra.mxu0 %v374
        %398 = vmatprep.subr.bf16.mxu0 0
        %399 = vmatpush1.bf16.msra.mxu0 %v375
        %400 = vmatprep.subr.bf16.mxu0 0
        %401 = vmatpush1.bf16.msra.mxu0 0
        %402 = vmatprep.subr.bf16.mxu0 0
        %403 = vmatpush1.bf16.msra.mxu0 0
        %404 = vmatprep.subr.bf16.mxu0 0
        %405 = vmatpush1.bf16.msra.mxu0 0
        %406 = vmatprep.subr.bf16.mxu0 0
        %407 = vmatpush1.bf16.msra.mxu0 0
        %408 = vmatprep.subr.bf16.mxu0 0
        %409 = vmatpush1.bf16.msra.mxu0 0
        %410 = vmatprep.subr.bf16.mxu0 0
        %411 = vmatpush1.bf16.msra.mxu0 0
        %412 = vmatprep.subr.bf16.mxu0 0
        %413 = vmatpush1.bf16.msra.mxu0 0
        %414 = vmatprep.subr.bf16.mxu0 0
        %415 = vmatpush1.bf16.msra.mxu0 0
        %416 = vmatprep.mubr.bf16.mxu0 0
        %417 = vmatmul.mubr.bf16.gmra.mrb[0].mxu0 %v332
        %v418 = vpop.f32.mrb[0].mxu0
        %v419 = vadd.f32 0.0, %v418
        %v420 = vpop.f32.mrb[0].mxu0
        %v421 = vpop.f32.mrb[0].mxu0
        %v422 = vadd.f32 0.0, %v421
        %v423 = vpop.f32.mrb[0].mxu0
        %424 = vmatprep.mubr.bf16.mxu0 0
        %425 = vmatmul.mubr.bf16.gmra.mrb[0].mxu0 %v333
        %v426 = vpop.f32.mrb[0].mxu0
        %v427 = vadd.f32 0.0, %v426
        %v428 = vpop.f32.mrb[0].mxu0
        %v429 = vpop.f32.mrb[0].mxu0
        %v430 = vadd.f32 0.0, %v429
        %v431 = vpop.f32.mrb[0].mxu0
        %432 = vdwg.mxu0
        %v433 = vadd.f32 %v300, %v419
        %v434 = vadd.f32 %v301, %v422
        %v435 = vadd.f32 %v302, %v427
        %v436 = vadd.f32 %v303, %v430
        %437 = vst [vmem:[#allocation2] sm:$0xff] %v433
        %438 = vst [vmem:[#allocation2 + $0x8] sm:$0xff] %v434
        %439 = vst [vmem:[#allocation2 + $0x10] sm:$0xff] %v435
        %440 = vst [vmem:[#allocation2 + $0x18] sm:$0xff] %v436
        // Predicated region
        $region41: #{decoder_forward.7} parent=27 // pred_check
          %p441 = pneg %p292
        $region42: #{decoder_forward.7} parent=27 // pred_check_branch
          %443 = sbr.rel (%p441) target = $region44
        $region43: #{decoder_forward.7} parent=27 // pred_region
          %v444 = vld [vmem:[#allocation2] sm:$0xff]
          %v445 = vld [vmem:[#allocation2 + $0x8] sm:$0xff]
          %v446 = vld [vmem:[#allocation2 + $0x10] sm:$0xff]
          %v447 = vld [vmem:[#allocation2 + $0x18] sm:$0xff]
          %448 = vst [vmem:[%s280] sm:$0xff] %v444
          %449 = vst [vmem:[%s280 + $0x8] sm:$0xff] %v445
          %450 = vst [vmem:[%s280 + $0x10] sm:$0xff] %v446
          %451 = vst [vmem:[%s280 + $0x18] sm:$0xff] %v447
          %v452 = vadd.f32 %v444, %v445
          %v453 = vadd.f32 %v452, %v446
          %v454 = vadd.f32 %v453, %v447
          %v455 = vrot.slane %v454, 4
          %v456 = vadd.f32 %v454, %v455
          %v457 = vrot.slane %v456, 2
          %v458 = vadd.f32 %v456, %v457
          %v459 = vrot.slane %v458, 1
          %v460 = vadd.f32 %v458, %v459
          %v461 = vmul.f32 %v444, %v444
          %v462 = vmul.f32 %v445, %v445
          %v463 = vmul.f32 %v446, %v446
          %v464 = vmul.f32 %v447, %v447
          %v465 = vadd.f32 %v461, %v462
          %v466 = vadd.f32 %v465, %v463
          %v467 = vadd.f32 %v466, %v464
          %v468 = vrot.slane %v467, 4
          %v469 = vadd.f32 %v467, %v468
          %v470 = vrot.slane %v469, 2
          %v471 = vadd.f32 %v469, %v470
          %v472 = vrot.slane %v471, 1
          %v473 = vadd.f32 %v471, %v472
          %vm474 = vcmask 1040384
          %v475 = vsel %vm474, %v460, %v473
          %vm476 = vcmask 1041408
          %v477 = vsel %vm476, %v475, 0.0
          %478 = vst [vmem:[%s287] sm:$0xff] %v477
        $region44: #{decoder_forward.7} parent=27 // pred_fallthru
          _
        %s479 = sand.u32 %s125, 1
        %s480 = scalar_lea.sflag [#allocation5], %s479
        %s481 = sand.u32 %s125, 1
        %s482 = smul.addr %s481, 32
        %s483 = scalar_lea.vmem [#allocation8], %s482
        %s484 = sand.u32 %s155, 1
        %s485 = scalar_lea.sflag [#allocation10], %s484
        %s486 = sand.u32 %s155, 1
        %s487 = smul.addr %s486, 8
        %s488 = scalar_lea.vmem [#allocation9], %s487
        // Predicated region
        $region45: #{decoder_forward.7} parent=27 // pred_check
          %p489 = pneg %p135
        $region46: #{decoder_forward.7} parent=27 // pred_check_branch
          %491 = sbr.rel (%p489) target = $region48
        $region47: #{decoder_forward.7} parent=27 // pred_region
          %s492 = smul.u32 4, %s34
          %s494 = ssub.s32 512, 512
          %495 = vsyncadd %s480, %s494
          %s496 = sadd.s32 %s35, %s492
          %s497 = smul.addr %s33, 4
          %s498 = sadd.s32 %s496, %s497
          %s499 = smul.addr %s498, 128
          %s500 = scalar_lea.hbm %s2, %s499
          %s501 = sshll.u32 %s483, 4
          %s502 = int_to_ptr.vmem [resolvable:$true] %s501
          %507 = dma.vmem_to_hbm [thread:$0]  %s502, 512, %s500, %s480, 128, 128, 8
        $region48: #{decoder_forward.7} parent=27 // pred_fallthru
          _
        // Predicated region
        $region49: #{decoder_forward.7} parent=27 // pred_check
          %p508 = pneg %p165
        $region50: #{decoder_forward.7} parent=27 // pred_check_branch
          %510 = sbr.rel (%p508) target = $region52
        $region51: #{decoder_forward.7} parent=27 // pred_region
          %s512 = ssub.s32 128, 128
          %513 = vsyncadd %s485, %s512
          %s514 = sadd.s32 %s35, %s34
          %s515 = sadd.s32 %s514, %s33
          %s516 = smul.addr %s515, 128
          %s517 = scalar_lea.hbm %s3, %s516
          %s519 = sshll.u32 %s488, 4
          %s520 = int_to_ptr.vmem [resolvable:$true] %s519
          %522 = dma.vmem_to_hbm [thread:$0]  %s520, 128, %s517, %s485
        $region52: #{decoder_forward.7} parent=27 // pred_fallthru
          _
      $region28: #{decoder_forward.7} parent=5 // pred_fallthru
        _
      %p523 = scmp.le.s32.totalorder 2, %s22
      // Predicated region
      $region53: #{decoder_forward.7} parent=5 // pred_check
        %p524 = pneg %p523
      $region54: #{decoder_forward.7} parent=5 // pred_check_branch
        %526 = sbr.rel (%p524) target = $region56
      $region55: #{decoder_forward.7} parent=5 // pred_region
        %s527 = ssub.s32 %s22, 2
        // Predicated region
        $region57: #{decoder_forward.7} parent=55 // pred_check
          %p528 = pneg %p141
        $region58: #{decoder_forward.7} parent=55 // pred_check_branch
          %530 = sbr.rel (%p528) target = $region60
        $region59: #{decoder_forward.7} parent=55 // pred_region
          %s531 = sand.u32 %s126, 1
          %s532 = scalar_lea.sflag [#allocation5], %s531
          %s533 = sand.u32 %s126, 1
          %s534 = smul.addr %s533, 32
          %s535 = scalar_lea.vmem [#allocation8], %s534
          %536 = dma.done %s532, 512
        $region60: #{decoder_forward.7} parent=55 // pred_fallthru
          _
        // Predicated region
        $region61: #{decoder_forward.7} parent=55 // pred_check
          %p537 = pneg %p171
        $region62: #{decoder_forward.7} parent=55 // pred_check_branch
          %539 = sbr.rel (%p537) target = $region64
        $region63: #{decoder_forward.7} parent=55 // pred_region
          %s540 = sand.u32 %s156, 1
          %s541 = scalar_lea.sflag [#allocation10], %s540
          %s542 = sand.u32 %s156, 1
          %s543 = smul.addr %s542, 8
          %s544 = scalar_lea.vmem [#allocation9], %s543
          %545 = dma.done %s541, 128
        $region64: #{decoder_forward.7} parent=55 // pred_fallthru
          _
      $region56: #{decoder_forward.7} parent=5 // pred_fallthru
        _
    $region6: #{decoder_forward.7} parent=1 // loop_footer
      %s26 = sadd.s32 1, %s22
    $region7: #{decoder_forward.7} parent=1 // loop_footer_branch
      %21 = sbr.rel target = $region3
    $region8: #{decoder_forward.7} parent=1 // loop_exit
      _
    %546 = vsyncpa [#allocation4], 1
    %s547 = scalar_lea.sflag [#allocation4], 1
    %548 = vsyncpa %s547, 1
    %549 = vsyncpa [#allocation7], 1
    %s550 = scalar_lea.sflag [#allocation7], 1
    %551 = vsyncpa %s550, 1
    %552 = vsyncpa [#allocation5], 1
    %s553 = scalar_lea.sflag [#allocation5], 1
    %554 = vsyncpa %s553, 1
    %555 = vsyncpa [#allocation10], 1
    %s556 = scalar_lea.sflag [#allocation10], 1
    %557 = vsyncpa %s556, 1

// kernel: decoder_forward.9
$region0: #{decoder_forward.9}
  #allocation0 [shape = 'u32[]', space=smem, size = 0x4, offset = 0x4, fixed_abs, tag = 'smem constant byte address 0x4 - core index']
  #allocation1 [shape = 'u32[144,128]{1,0:T(1,128)}', space=vmem, size = 0x12000, scoped, tag = 'internal scratch']
  #allocation2 [shape = 'f32[128,128]{1,0:T(8,128)}', space=vmem, size = 0x10000, scoped, tag = 'scratch operand']
  %s0 = inlined_call_operand.hbm [shape: bf16[4,128,128], index: 0, kind: input, shape index: {}]
  %s1 = inlined_call_operand.hbm [shape: bf16[4,128,128], index: 1, kind: input, shape index: {}]
  %s2 = inlined_call_operand.hbm [shape: f32[4,128,128], index: 2, kind: output, shape index: {}]
  %s3 = sld [smem:[#allocation0]]
  $region57: #{decoder_forward.9} parent=0
    _
  %s5 = ssub.s32 1, %s3
  %s6 = scalar_select 0, %s5, %s3
  $region1: #{decoder_forward.9} parent=0
    #allocation3 [shape = 'u8[65536]{0}', space=vmem, size = 0x10000, scoped, tag = 'input window, operand 0']
    #allocation4 [shape = 's32[2]{0}', space=sflag, size = 0x8, scoped, tag = 'scoped memory for decoder_forward.9']
    #allocation5 [shape = 's32[2]{0}', space=sflag, size = 0x8, scoped, tag = 'scoped memory for decoder_forward.9']
    #allocation6 [shape = 'u8[65536]{0}', space=vmem, size = 0x10000, scoped, tag = 'input window, operand 1']
    #allocation7 [shape = 's32[2]{0}', space=sflag, size = 0x8, scoped, tag = 'scoped memory for decoder_forward.9']
    #allocation8 [shape = 'u8[131072]{0}', space=vmem, size = 0x20000, scoped, tag = 'output window, operand 0']
    %7 = vsyncpa [#allocation4], 0
    %s8 = scalar_lea.sflag [#allocation4], 1
    %9 = vsyncpa %s8, 0
    %10 = vsyncpa [#allocation7], 0
    %s11 = scalar_lea.sflag [#allocation7], 1
    %12 = vsyncpa %s11, 0
    %13 = vsyncpa [#allocation5], 0
    %s14 = scalar_lea.sflag [#allocation5], 1
    %15 = vsyncpa %s14, 0
    loop: start=0, step=1, limit=6
    $region2: #{decoder_forward.9} parent=1 // loop_pre_header
      _
    $region3: #{decoder_forward.9} parent=1 // loop_header
      %s17 = sphi 0, %s21
      %p18 = scmp.ge.s32.totalorder %s17, 6
      %s24 = sphi 0, %s50
      %s25 = sphi 0, %s46
      %s26 = sphi 0, %s42
      %s27 = sphi 0, %s38
      %s28 = sphi 0, %s24
      %s29 = sphi 0, %s25
      %s30 = sphi 0, %s26
      %s31 = sphi 0, %s27
      %s32 = sphi 0, %s28
      %s33 = sphi 0, %s29
      %s34 = sphi 0, %s30
      %s35 = sphi 0, %s31
      %s57 = sphi 0, %s59
      %s60 = sphi 0, %s57
      %s61 = sphi 0, %s60
      %s77 = sphi 0, %s61
      %s87 = sphi 0, %s89
      %s90 = sphi 0, %s87
      %s91 = sphi 0, %s90
      %s107 = sphi 0, %s91
      %s117 = sphi 0, %s119
      %s120 = sphi 0, %s117
      %s121 = sphi 0, %s120
      %s137 = sphi 0, %s121
    $region4: #{decoder_forward.9} parent=1 // loop_header_branch
      %20 = sbr.rel (%p18) target = $region8
    $region5: #{decoder_forward.9} parent=1 // loop_body
      %s22 = ssub.s32 %s17, 1
      %s23 = ssub.s32 %s17, 2
      %s36 = sadd.s32 1, %s27
      %p37 = scmp.ge.s32.totalorder %s36, 1
      %s38 = scalar_select %p37, 0, %s36
      %s39 = sadd.s32 1, %s26
      %s40 = scalar_select %p37, %s39, %s26
      %p41 = scmp.ge.s32.totalorder %s40, 1
      %s42 = scalar_select %p41, 0, %s40
      %s43 = sadd.s32 1, %s25
      %s44 = scalar_select %p41, %s43, %s25
      %p45 = scmp.ge.s32.totalorder %s44, 1
      %s46 = scalar_select %p45, 0, %s44
      %s47 = sadd.s32 1, %s24
      %s48 = scalar_select %p45, %s47, %s24
      %p49 = scmp.ge.s32.totalorder %s48, 4
      %s50 = scalar_select %p49, 0, %s48
      %s51 = ssub.s32 %s24, %s50
      %s52 = ssub.s32 %s25, %s46
      %s53 = sor.u32 %s51, %s52
      %s54 = ssub.s32 %s27, %s38
      %s55 = sor.u32 %s53, %s54
      %p56 = scmp.eq.s32.totalorder %s55, 0
      %s58 = sadd.s32 %s57, 1
      %s59 = scalar_select %p56, %s57, %s58
      %p62 = pneg %p56
      %p63 = scmp.eq.s32.totalorder %s17, 3
      %p64 = por %p62, %p63
      %p65 = scmp.ne.s32.totalorder %s57, %s60
      %p66 = scmp.eq.s32.totalorder %s17, 0
      %p67 = por %p65, %p66
      %p68 = scmp.ne.s32.totalorder %s57, %s60
      %p69 = scmp.eq.s32.totalorder %s22, 3
      %p70 = por %p68, %p69
      %p71 = scmp.ne.s32.totalorder %s60, %s61
      %p72 = scmp.eq.s32.totalorder %s22, 0
      %p73 = por %p71, %p72
      %p74 = scmp.ne.s32.totalorder %s60, %s61
      %p75 = scmp.eq.s32.totalorder %s23, 3
      %p76 = por %p74, %p75
      %p78 = scmp.ne.s32.totalorder %s61, %s77
      %p79 = scmp.eq.s32.totalorder %s23, 0
      %p80 = por %p78, %p79
      %s81 = ssub.s32 %s24, %s50
      %s82 = ssub.s32 %s27, %s38
      %s83 = sor.u32 %s81, %s82
      %s84 = ssub.s32 %s26, %s42
      %s85 = sor.u32 %s83, %s84
      %p86 = scmp.eq.s32.totalorder %s85, 0
      %s88 = sadd.s32 %s87, 1
      %s89 = scalar_select %p86, %s87, %s88
      %p92 = pneg %p86
      %p93 = scmp.eq.s32.totalorder %s17, 3
      %p94 = por %p92, %p93
      %p95 = scmp.ne.s32.totalorder %s87, %s90
      %p96 = scmp.eq.s32.totalorder %s17, 0
      %p97 = por %p95, %p96
      %p98 = scmp.ne.s32.totalorder %s87, %s90
      %p99 = scmp.eq.s32.totalorder %s22, 3
      %p100 = por %p98, %p99
      %p101 = scmp.ne.s32.totalorder %s90, %s91
      %p102 = scmp.eq.s32.totalorder %s22, 0
      %p103 = por %p101, %p102
      %p104 = scmp.ne.s32.totalorder %s90, %s91
      %p105 = scmp.eq.s32.totalorder %s23, 3
      %p106 = por %p104, %p105
      %p108 = scmp.ne.s32.totalorder %s91, %s107
      %p109 = scmp.eq.s32.totalorder %s23, 0
      %p110 = por %p108, %p109
      %s111 = ssub.s32 %s24, %s50
      %s112 = ssub.s32 %s25, %s46
      %s113 = sor.u32 %s111, %s112
      %s114 = ssub.s32 %s26, %s42
      %s115 = sor.u32 %s113, %s114
      %p116 = scmp.eq.s32.totalorder %s115, 0
      %s118 = sadd.s32 %s117, 1
      %s119 = scalar_select %p116, %s117, %s118
      %p122 = pneg %p116
      %p123 = scmp.eq.s32.totalorder %s17, 3
      %p124 = por %p122, %p123
      %p125 = scmp.ne.s32.totalorder %s117, %s120
      %p126 = scmp.eq.s32.totalorder %s17, 0
      %p127 = por %p125, %p126
      %p128 = scmp.ne.s32.totalorder %s117, %s120
      %p129 = scmp.eq.s32.totalorder %s22, 3
      %p130 = por %p128, %p129
      %p131 = scmp.ne.s32.totalorder %s120, %s121
      %p132 = scmp.eq.s32.totalorder %s22, 0
      %p133 = por %p131, %p132
      %p134 = scmp.ne.s32.totalorder %s120, %s121
      %p135 = scmp.eq.s32.totalorder %s23, 3
      %p136 = por %p134, %p135
      %p138 = scmp.ne.s32.totalorder %s121, %s137
      %p139 = scmp.eq.s32.totalorder %s23, 0
      %p140 = por %p138, %p139
      %p141 = scmp.le.s32.totalorder 1, %s17
      %p142 = scmp.lt.s32.totalorder %s17, 5
      %p143 = pnand %p141, %p142
      %p144 = pneg %p143
      // Predicated region
      $region9: #{decoder_forward.9} parent=5 // pred_check
        _
      $region10: #{decoder_forward.9} parent=5 // pred_check_branch
        %146 = sbr.rel (%p143) target = $region12
      $region11: #{decoder_forward.9} parent=5 // pred_region
        %s147 = ssub.s32 %s17, 1
      $region12: #{decoder_forward.9} parent=5 // pred_fallthru
        _
      %p148 = scmp.lt.s32.totalorder %s17, 4
      // Predicated region
      $region13: #{decoder_forward.9} parent=5 // pred_check
        %p149 = pneg %p148
      $region14: #{decoder_forward.9} parent=5 // pred_check_branch
        %151 = sbr.rel (%p149) target = $region16
      $region15: #{decoder_forward.9} parent=5 // pred_region
        // Predicated region
        $region17: #{decoder_forward.9} parent=15 // pred_check
          %p152 = pneg %p67
        $region18: #{decoder_forward.9} parent=15 // pred_check_branch
          %154 = sbr.rel (%p152) target = $region20
        $region19: #{decoder_forward.9} parent=15 // pred_region
          %s155 = sand.u32 %s57, 1
          %s156 = scalar_lea.sflag [#allocation4], %s155
          %s157 = sand.u32 %s57, 1
          %s158 = smul.addr %s157, 64
          %s159 = scalar_lea.vmem [#allocation3], %s158
          %s160 = smul.u32 16, %s25
          %s162 = ssub.s32 1024, 1024
          %163 = vsyncadd %s156, %s162
          %s164 = sadd.s32 %s27, %s160
          %s165 = smul.addr %s24, 16
          %s166 = sadd.s32 %s164, %s165
          %s167 = smul.addr %s166, 64
          %s168 = scalar_lea.hbm %s0, %s167
          %s169 = sshll.u32 %s159, 4
          %s170 = int_to_ptr.vmem [resolvable:$true] %s169
          %175 = dma.hbm_to_vmem [thread:$0]  %s168, 1024, %s170, %s156, 64, 64, 4
        $region20: #{decoder_forward.9} parent=15 // pred_fallthru
          _
        // Predicated region
        $region21: #{decoder_forward.9} parent=15 // pred_check
          %p176 = pneg %p97
        $region22: #{decoder_forward.9} parent=15 // pred_check_branch
          %178 = sbr.rel (%p176) target = $region24
        $region23: #{decoder_forward.9} parent=15 // pred_region
          %s179 = sand.u32 %s87, 1
          %s180 = scalar_lea.sflag [#allocation7], %s179
          %s181 = sand.u32 %s87, 1
          %s182 = smul.addr %s181, 64
          %s183 = scalar_lea.vmem [#allocation6], %s182
          %s184 = smul.u32 16, %s27
          %s186 = ssub.s32 1024, 1024
          %187 = vsyncadd %s180, %s186
          %s188 = sadd.s32 %s26, %s184
          %s189 = smul.addr %s24, 16
          %s190 = sadd.s32 %s188, %s189
          %s191 = smul.addr %s190, 64
          %s192 = scalar_lea.hbm %s1, %s191
          %s193 = sshll.u32 %s183, 4
          %s194 = int_to_ptr.vmem [resolvable:$true] %s193
          %199 = dma.hbm_to_vmem [thread:$0]  %s192, 1024, %s194, %s180, 64, 64, 4
        $region24: #{decoder_forward.9} parent=15 // pred_fallthru
          _
      $region16: #{decoder_forward.9} parent=5 // pred_fallthru
        _
      %p200 = scmp.le.s32.totalorder 1, %s17
      %p201 = scmp.lt.s32.totalorder %s17, 5
      %p202 = pnand %p200, %p201
      %p203 = pneg %p202
      // Predicated region
      $region25: #{decoder_forward.9} parent=5 // pred_check
        _
      $region26: #{decoder_forward.9} parent=5 // pred_check_branch
        %205 = sbr.rel (%p202) target = $region28
      $region27: #{decoder_forward.9} parent=5 // pred_region
        %s206 = ssub.s32 %s17, 1
        %s207 = sand.u32 %s60, 1
        %s208 = scalar_lea.sflag [#allocation4], %s207
        %s209 = sand.u32 %s60, 1
        %s210 = smul.addr %s209, 64
        %s211 = scalar_lea.vmem [#allocation3], %s210
        // Predicated region
        $region29: #{decoder_forward.9} parent=27 // pred_check
          %p212 = pneg %p73
        $region30: #{decoder_forward.9} parent=27 // pred_check_branch
          %214 = sbr.rel (%p212) target = $region32
        $region31: #{decoder_forward.9} parent=27 // pred_region
          %215 = dma.done %s208, 1024
        $region32: #{decoder_forward.9} parent=27 // pred_fallthru
          _
        %s216 = sand.u32 %s90, 1
        %s217 = scalar_lea.sflag [#allocation7], %s216
        %s218 = sand.u32 %s90, 1
        %s219 = smul.addr %s218, 64
        %s220 = scalar_lea.vmem [#allocation6], %s219
        // Predicated region
        $region33: #{decoder_forward.9} parent=27 // pred_check
          %p221 = pneg %p103
        $region34: #{decoder_forward.9} parent=27 // pred_check_branch
          %223 = sbr.rel (%p221) target = $region36
        $region35: #{decoder_forward.9} parent=27 // pred_region
          %224 = dma.done %s217, 1024
        $region36: #{decoder_forward.9} parent=27 // pred_fallthru
          _
        %s225 = sand.u32 %s60, 1
        %s226 = scalar_lea.sflag [#allocation4], %s225
        %s227 = sand.u32 %s60, 1
        %s228 = smul.addr %s227, 64
        %s229 = scalar_lea.vmem [#allocation3], %s228
        %p230 = pneg %p73
        %p231 = pneg %p70
        %s232 = sand.u32 %s90, 1
        %s233 = scalar_lea.sflag [#allocation7], %s232
        %s234 = sand.u32 %s90, 1
        %s235 = smul.addr %s234, 64
        %s236 = scalar_lea.vmem [#allocation6], %s235
        %p237 = pneg %p103
        %p238 = pneg %p100
        %p239 = pneg %p133
        %p240 = pneg %p130
        %s241 = sand.u32 %s120, 1
        %s242 = scalar_lea.sflag [#allocation5], %s241
        %s243 = sand.u32 %s120, 1
        %s244 = smul.addr %s243, 128
        %s245 = scalar_lea.vmem [#allocation8], %s244
        %s246 = smul.u32 16, %s29
        %s247 = smul.u32 16, %s31
        %s248 = smul.u32 16, %s29
        %p250 = scmp.eq.s32.totalorder %s31, 0
        // Predicated region
        $region37: #{decoder_forward.9} parent=27 // pred_check
          %p251 = pneg %p250
        $region38: #{decoder_forward.9} parent=27 // pred_check_branch
          %253 = sbr.rel (%p251) target = $region40
        $region39: #{decoder_forward.9} parent=27 // pred_region
          %254 = vst [vmem:[#allocation2] sm:$0xff] 0.0
          %255 = vst [vmem:[#allocation2 + $0x8] sm:$0xff] 0.0
          %256 = vst [vmem:[#allocation2 + $0x10] sm:$0xff] 0.0
          %257 = vst [vmem:[#allocation2 + $0x18] sm:$0xff] 0.0
          %258 = vst [vmem:[#allocation2 + $0x20] sm:$0xff] 0.0
          %259 = vst [vmem:[#allocation2 + $0x28] sm:$0xff] 0.0
          %260 = vst [vmem:[#allocation2 + $0x30] sm:$0xff] 0.0
          %261 = vst [vmem:[#allocation2 + $0x38] sm:$0xff] 0.0
          %262 = vst [vmem:[#allocation2 + $0x40] sm:$0xff] 0.0
          %263 = vst [vmem:[#allocation2 + $0x48] sm:$0xff] 0.0
          %264 = vst [vmem:[#allocation2 + $0x50] sm:$0xff] 0.0
          %265 = vst [vmem:[#allocation2 + $0x58] sm:$0xff] 0.0
          %266 = vst [vmem:[#allocation2 + $0x60] sm:$0xff] 0.0
          %267 = vst [vmem:[#allocation2 + $0x68] sm:$0xff] 0.0
          %268 = vst [vmem:[#allocation2 + $0x70] sm:$0xff] 0.0
          %269 = vst [vmem:[#allocation2 + $0x78] sm:$0xff] 0.0
        $region40: #{decoder_forward.9} parent=27 // pred_fallthru
          _
        %v270 = vld [vmem:[#allocation2] sm:$0xff]
        %v271 = vld [vmem:[#allocation2 + $0x8] sm:$0xff]
        %v272 = vld [vmem:[#allocation2 + $0x10] sm:$0xff]
        %v273 = vld [vmem:[#allocation2 + $0x18] sm:$0xff]
        %v274 = vld [vmem:[#allocation2 + $0x20] sm:$0xff]
        %v275 = vld [vmem:[#allocation2 + $0x28] sm:$0xff]
        %v276 = vld [vmem:[#allocation2 + $0x30] sm:$0xff]
        %v277 = vld [vmem:[#allocation2 + $0x38] sm:$0xff]
        %v278 = vld [vmem:[#allocation2 + $0x40] sm:$0xff]
        %v279 = vld [vmem:[#allocation2 + $0x48] sm:$0xff]
        %v280 = vld [vmem:[#allocation2 + $0x50] sm:$0xff]
        %v281 = vld [vmem:[#allocation2 + $0x58] sm:$0xff]
        %v282 = vld [vmem:[#allocation2 + $0x60] sm:$0xff]
        %v283 = vld [vmem:[#allocation2 + $0x68] sm:$0xff]
        %v284 = vld [vmem:[#allocation2 + $0x70] sm:$0xff]
        %v285 = vld [vmem:[#allocation2 + $0x78] sm:$0xff]
        %v286 = vld [vmem:[%s211] sm:$0xf]
        %v287 = vld [vmem:[%s211 + $0x4] sm:$0xf]
        %v288 = vld [vmem:[%s211 + $0x8] sm:$0xf]
        %v289 = vld [vmem:[%s211 + $0xc] sm:$0xf]
        %v290 = vld [vmem:[%s211 + $0x10] sm:$0xf]
        %v291 = vld [vmem:[%s211 + $0x14] sm:$0xf]
        %v292 = vld [vmem:[%s211 + $0x18] sm:$0xf]
        %v293 = vld [vmem:[%s211 + $0x1c] sm:$0xf]
        %v294 = vld [vmem:[%s211 + $0x20] sm:$0xf]
        %v295 = vld [vmem:[%s211 + $0x24] sm:$0xf]
        %v296 = vld [vmem:[%s211 + $0x28] sm:$0xf]
        %v297 = vld [vmem:[%s211 + $0x2c] sm:$0xf]
        %v298 = vld [vmem:[%s211 + $0x30] sm:$0xf]
        %v299 = vld [vmem:[%s211 + $0x34] sm:$0xf]
        %v300 = vld [vmem:[%s211 + $0x38] sm:$0xf]
        %v301 = vld [vmem:[%s211 + $0x3c] sm:$0xf]
        %v302 = vld [vmem:[%s220] sm:$0xf]
        %v303 = vld [vmem:[%s220 + $0x4] sm:$0xf]
        %v304 = vld [vmem:[%s220 + $0x8] sm:$0xf]
        %v305 = vld [vmem:[%s220 + $0xc] sm:$0xf]
        %v306 = vld [vmem:[%s220 + $0x10] sm:$0xf]
        %v307 = vld [vmem:[%s220 + $0x14] sm:$0xf]
        %v308 = vld [vmem:[%s220 + $0x18] sm:$0xf]
        %v309 = vld [vmem:[%s220 + $0x1c] sm:$0xf]
        %v310 = vld [vmem:[%s220 + $0x20] sm:$0xf]
        %v311 = vld [vmem:[%s220 + $0x24] sm:$0xf]
        %v312 = vld [vmem:[%s220 + $0x28] sm:$0xf]
        %v313 = vld [vmem:[%s220 + $0x2c] sm:$0xf]
        %v314 = vld [vmem:[%s220 + $0x30] sm:$0xf]
        %v315 = vld [vmem:[%s220 + $0x34] sm:$0xf]
        %v316 = vld [vmem:[%s220 + $0x38] sm:$0xf]
        %v317 = vld [vmem:[%s220 + $0x3c] sm:$0xf]
        %v334 = vunpack.c.l.b16 %v286
        %v335 = vunpack.c.l.b16 %v287
        %v336 = vunpack.c.l.b16 %v288
        %v337 = vunpack.c.l.b16 %v289
        %v338 = vunpack.c.l.b16 %v290
        %v339 = vunpack.c.l.b16 %v291
        %v340 = vunpack.c.l.b16 %v292
        %v341 = vunpack.c.l.b16 %v293
        %v342 = vunpack.c.l.b16 %v294
        %v343 = vunpack.c.l.b16 %v295
        %v344 = vunpack.c.l.b16 %v296
        %v345 = vunpack.c.l.b16 %v297
        %v346 = vunpack.c.l.b16 %v298
        %v347 = vunpack.c.l.b16 %v299
        %v348 = vunpack.c.l.b16 %v300
        %v349 = vunpack.c.l.b16 %v301
        %v350 = vpack.c.b16 %v335, %v334
        %v351 = vpack.c.b16 %v337, %v336
        %v352 = vpack.c.b16 %v339, %v338
        %v353 = vpack.c.b16 %v341, %v340
        %v354 = vpack.c.b16 %v343, %v342
        %v355 = vpack.c.b16 %v345, %v344
        %v356 = vpack.c.b16 %v347, %v346
        %v357 = vpack.c.b16 %v349, %v348
        %v382 = vunpack.c.l.b16 %v302
        %v383 = vunpack.c.l.b16 %v303
        %v384 = vunpack.c.l.b16 %v304
        %v385 = vunpack.c.l.b16 %v305
        %v386 = vunpack.c.l.b16 %v306
        %v387 = vunpack.c.l.b16 %v307
        %v388 = vunpack.c.l.b16 %v308
        %v389 = vunpack.c.l.b16 %v309
        %v390 = vunpack.c.l.b16 %v310
        %v391 = vunpack.c.l.b16 %v311
        %v392 = vunpack.c.l.b16 %v312
        %v393 = vunpack.c.l.b16 %v313
        %v394 = vunpack.c.l.b16 %v314
        %v395 = vunpack.c.l.b16 %v315
        %v396 = vunpack.c.l.b16 %v316
        %v397 = vunpack.c.l.b16 %v317
        %v398 = vpack.c.b16 %v383, %v382
        %v399 = vpack.c.b16 %v385, %v384
        %v400 = vpack.c.b16 %v387, %v386
        %v401 = vpack.c.b16 %v389, %v388
        %v402 = vpack.c.b16 %v391, %v390
        %v403 = vpack.c.b16 %v393, %v392
        %v404 = vpack.c.b16 %v395, %v394
        %v405 = vpack.c.b16 %v397, %v396
        %414 = vmatprep.subr.bf16.mxu0 0
        %415 = vmatpush1.bf16.msra.mxu0 %v398
        %416 = vmatprep.subr.bf16.mxu0 0
        %417 = vmatpush1.bf16.msra.mxu0 %v399
        %418 = vmatprep.subr.bf16.mxu0 0
        %419 = vmatpush1.bf16.msra.mxu0 %v400
        %420 = vmatprep.subr.bf16.mxu0 0
        %421 = vmatpush1.bf16.msra.mxu0 %v401
        %422 = vmatprep.subr.bf16.mxu0 0
        %423 = vmatpush1.bf16.msra.mxu0 %v402
        %424 = vmatprep.subr.bf16.mxu0 0
        %425 = vmatpush1.bf16.msra.mxu0 %v403
        %426 = vmatprep.subr.bf16.mxu0 0
        %427 = vmatpush1.bf16.msra.mxu0 %v404
        %428 = vmatprep.subr.bf16.mxu0 0
        %429 = vmatpush1.bf16.msra.mxu0 %v405
        %430 = vmatprep.subr.bf16.mxu0 0
        %431 = vmatpush1.bf16.msra.mxu0 0
        %432 = vmatprep.subr.bf16.mxu0 0
        %433 = vmatpush1.bf16.msra.mxu0 0
        %434 = vmatprep.subr.bf16.mxu0 0
        %435 = vmatpush1.bf16.msra.mxu0 0
        %436 = vmatprep.subr.bf16.mxu0 0
        %437 = vmatpush1.bf16.msra.mxu0 0
        %438 = vmatprep.subr.bf16.mxu0 0
        %439 = vmatpush1.bf16.msra.mxu0 0
        %440 = vmatprep.subr.bf16.mxu0 0
        %441 = vmatpush1.bf16.msra.mxu0 0
        %442 = vmatprep.subr.bf16.mxu0 0
        %443 = vmatpush1.bf16.msra.mxu0 0
        %444 = vmatprep.subr.bf16.mxu0 0
        %445 = vmatpush1.bf16.msra.mxu0 0
        %446 = vmatprep.mubr.bf16.mxu0 0
        %447 = vmatmul.mubr.bf16.gmra.mrb[0].mxu0 %v350
        %v448 = vpop.f32.mrb[0].mxu0
        %v449 = vadd.f32 0.0, %v448
        %v450 = vpop.f32.mrb[0].mxu0
        %v451 = vpop.f32.mrb[0].mxu0
        %v452 = vadd.f32 0.0, %v451
        %v453 = vpop.f32.mrb[0].mxu0
        %454 = vmatprep.mubr.bf16.mxu0 0
        %455 = vmatmul.mubr.bf16.gmra.mrb[0].mxu0 %v351
        %v456 = vpop.f32.mrb[0].mxu0
        %v457 = vadd.f32 0.0, %v456
        %v458 = vpop.f32.mrb[0].mxu0
        %v459 = vpop.f32.mrb[0].mxu0
        %v460 = vadd.f32 0.0, %v459
        %v461 = vpop.f32.mrb[0].mxu0
        %462 = vmatprep.mubr.bf16.mxu0 0
        %463 = vmatmul.mubr.bf16.gmra.mrb[0].mxu0 %v352
        %v464 = vpop.f32.mrb[0].mxu0
        %v465 = vadd.f32 0.0, %v464
        %v466 = vpop.f32.mrb[0].mxu0
        %v467 = vpop.f32.mrb[0].mxu0
        %v468 = vadd.f32 0.0, %v467
        %v469 = vpop.f32.mrb[0].mxu0
        %470 = vmatprep.mubr.bf16.mxu0 0
        %471 = vmatmul.mubr.bf16.gmra.mrb[0].mxu0 %v353
        %v472 = vpop.f32.mrb[0].mxu0
        %v473 = vadd.f32 0.0, %v472
        %v474 = vpop.f32.mrb[0].mxu0
        %v475 = vpop.f32.mrb[0].mxu0
        %v476 = vadd.f32 0.0, %v475
        %v477 = vpop.f32.mrb[0].mxu0
        %478 = vmatprep.mubr.bf16.mxu0 0
        %479 = vmatmul.mubr.bf16.gmra.mrb[0].mxu0 %v354
        %v480 = vpop.f32.mrb[0].mxu0
        %v481 = vadd.f32 0.0, %v480
        %v482 = vpop.f32.mrb[0].mxu0
        %v483 = vpop.f32.mrb[0].mxu0
        %v484 = vadd.f32 0.0, %v483
        %v485 = vpop.f32.mrb[0].mxu0
        %486 = vmatprep.mubr.bf16.mxu0 0
        %487 = vmatmul.mubr.bf16.gmra.mrb[0].mxu0 %v355
        %v488 = vpop.f32.mrb[0].mxu0
        %v489 = vadd.f32 0.0, %v488
        %v490 = vpop.f32.mrb[0].mxu0
        %v491 = vpop.f32.mrb[0].mxu0
        %v492 = vadd.f32 0.0, %v491
        %v493 = vpop.f32.mrb[0].mxu0
        %494 = vmatprep.mubr.bf16.mxu0 0
        %495 = vmatmul.mubr.bf16.gmra.mrb[0].mxu0 %v356
        %v496 = vpop.f32.mrb[0].mxu0
        %v497 = vadd.f32 0.0, %v496
        %v498 = vpop.f32.mrb[0].mxu0
        %v499 = vpop.f32.mrb[0].mxu0
        %v500 = vadd.f32 0.0, %v499
        %v501 = vpop.f32.mrb[0].mxu0
        %502 = vmatprep.mubr.bf16.mxu0 0
        %503 = vmatmul.mubr.bf16.gmra.mrb[0].mxu0 %v357
        %v504 = vpop.f32.mrb[0].mxu0
        %v505 = vadd.f32 0.0, %v504
        %v506 = vpop.f32.mrb[0].mxu0
        %v507 = vpop.f32.mrb[0].mxu0
        %v508 = vadd.f32 0.0, %v507
        %v509 = vpop.f32.mrb[0].mxu0
        %510 = vdwg.mxu0
        %v511 = vadd.f32 %v270, %v449
        %v512 = vadd.f32 %v271, %v452
        %v513 = vadd.f32 %v272, %v457
        %v514 = vadd.f32 %v273, %v460
        %v515 = vadd.f32 %v274, %v465
        %v516 = vadd.f32 %v275, %v468
        %v517 = vadd.f32 %v276, %v473
        %v518 = vadd.f32 %v277, %v476
        %v519 = vadd.f32 %v278, %v481
        %v520 = vadd.f32 %v279, %v484
        %v521 = vadd.f32 %v280, %v489
        %v522 = vadd.f32 %v281, %v492
        %v523 = vadd.f32 %v282, %v497
        %v524 = vadd.f32 %v283, %v500
        %v525 = vadd.f32 %v284, %v505
        %v526 = vadd.f32 %v285, %v508
        %527 = vst [vmem:[#allocation2] sm:$0xff] %v511
        %528 = vst [vmem:[#allocation2 + $0x8] sm:$0xff] %v512
        %529 = vst [vmem:[#allocation2 + $0x10] sm:$0xff] %v513
        %530 = vst [vmem:[#allocation2 + $0x18] sm:$0xff] %v514
        %531 = vst [vmem:[#allocation2 + $0x20] sm:$0xff] %v515
        %532 = vst [vmem:[#allocation2 + $0x28] sm:$0xff] %v516
        %533 = vst [vmem:[#allocation2 + $0x30] sm:$0xff] %v517
        %534 = vst [vmem:[#allocation2 + $0x38] sm:$0xff] %v518
        %535 = vst [vmem:[#allocation2 + $0x40] sm:$0xff] %v519
        %536 = vst [vmem:[#allocation2 + $0x48] sm:$0xff] %v520
        %537 = vst [vmem:[#allocation2 + $0x50] sm:$0xff] %v521
        %538 = vst [vmem:[#allocation2 + $0x58] sm:$0xff] %v522
        %539 = vst [vmem:[#allocation2 + $0x60] sm:$0xff] %v523
        %540 = vst [vmem:[#allocation2 + $0x68] sm:$0xff] %v524
        %541 = vst [vmem:[#allocation2 + $0x70] sm:$0xff] %v525
        %542 = vst [vmem:[#allocation2 + $0x78] sm:$0xff] %v526
        // Predicated region
        $region41: #{decoder_forward.9} parent=27 // pred_check
          %p543 = pneg %p250
        $region42: #{decoder_forward.9} parent=27 // pred_check_branch
          %545 = sbr.rel (%p543) target = $region44
        $region43: #{decoder_forward.9} parent=27 // pred_region
          %v546 = vld [vmem:[#allocation2] sm:$0xff]
          %v547 = vld [vmem:[#allocation2 + $0x8] sm:$0xff]
          %v548 = vld [vmem:[#allocation2 + $0x10] sm:$0xff]
          %v549 = vld [vmem:[#allocation2 + $0x18] sm:$0xff]
          %v550 = vld [vmem:[#allocation2 + $0x20] sm:$0xff]
          %v551 = vld [vmem:[#allocation2 + $0x28] sm:$0xff]
          %v552 = vld [vmem:[#allocation2 + $0x30] sm:$0xff]
          %v553 = vld [vmem:[#allocation2 + $0x38] sm:$0xff]
          %v554 = vld [vmem:[#allocation2 + $0x40] sm:$0xff]
          %v555 = vld [vmem:[#allocation2 + $0x48] sm:$0xff]
          %v556 = vld [vmem:[#allocation2 + $0x50] sm:$0xff]
          %v557 = vld [vmem:[#allocation2 + $0x58] sm:$0xff]
          %v558 = vld [vmem:[#allocation2 + $0x60] sm:$0xff]
          %v559 = vld [vmem:[#allocation2 + $0x68] sm:$0xff]
          %v560 = vld [vmem:[#allocation2 + $0x70] sm:$0xff]
          %v561 = vld [vmem:[#allocation2 + $0x78] sm:$0xff]
          %v562 = vtanh.pop %v546
          %v563 = vtanh.pop %v547
          %v564 = vtanh.pop %v548
          %v565 = vtanh.pop %v549
          %v566 = vtanh.pop %v550
          %v567 = vtanh.pop %v551
          %v568 = vtanh.pop %v552
          %v569 = vtanh.pop %v553
          %v570 = vtanh.pop %v554
          %v571 = vtanh.pop %v555
          %v572 = vtanh.pop %v556
          %v573 = vtanh.pop %v557
          %v574 = vtanh.pop %v558
          %v575 = vtanh.pop %v559
          %v576 = vtanh.pop %v560
          %v577 = vtanh.pop %v561
          %578 = vst [vmem:[%s245] sm:$0xff] %v562
          %579 = vst [vmem:[%s245 + $0x8] sm:$0xff] %v563
          %580 = vst [vmem:[%s245 + $0x10] sm:$0xff] %v564
          %581 = vst [vmem:[%s245 + $0x18] sm:$0xff] %v565
          %582 = vst [vmem:[%s245 + $0x20] sm:$0xff] %v566
          %583 = vst [vmem:[%s245 + $0x28] sm:$0xff] %v567
          %584 = vst [vmem:[%s245 + $0x30] sm:$0xff] %v568
          %585 = vst [vmem:[%s245 + $0x38] sm:$0xff] %v569
          %586 = vst [vmem:[%s245 + $0x40] sm:$0xff] %v570
          %587 = vst [vmem:[%s245 + $0x48] sm:$0xff] %v571
          %588 = vst [vmem:[%s245 + $0x50] sm:$0xff] %v572
          %589 = vst [vmem:[%s245 + $0x58] sm:$0xff] %v573
          %590 = vst [vmem:[%s245 + $0x60] sm:$0xff] %v574
          %591 = vst [vmem:[%s245 + $0x68] sm:$0xff] %v575
          %592 = vst [vmem:[%s245 + $0x70] sm:$0xff] %v576
          %593 = vst [vmem:[%s245 + $0x78] sm:$0xff] %v577
        $region44: #{decoder_forward.9} parent=27 // pred_fallthru
          _
        %s594 = sand.u32 %s120, 1
        %s595 = scalar_lea.sflag [#allocation5], %s594
        %s596 = sand.u32 %s120, 1
        %s597 = smul.addr %s596, 128
        %s598 = scalar_lea.vmem [#allocation8], %s597
        // Predicated region
        $region45: #{decoder_forward.9} parent=27 // pred_check
          %p599 = pneg %p130
        $region46: #{decoder_forward.9} parent=27 // pred_check_branch
          %601 = sbr.rel (%p599) target = $region48
        $region47: #{decoder_forward.9} parent=27 // pred_region
          %s602 = smul.u32 16, %s29
          %s604 = ssub.s32 2048, 2048
          %605 = vsyncadd %s595, %s604
          %s606 = sadd.s32 %s30, %s602
          %s607 = smul.addr %s28, 16
          %s608 = sadd.s32 %s606, %s607
          %s609 = smul.addr %s608, 128
          %s610 = scalar_lea.hbm %s2, %s609
          %s611 = sshll.u32 %s598, 4
          %s612 = int_to_ptr.vmem [resolvable:$true] %s611
          %617 = dma.vmem_to_hbm [thread:$0]  %s612, 2048, %s610, %s595, 128, 128, 8
        $region48: #{decoder_forward.9} parent=27 // pred_fallthru
          _
      $region28: #{decoder_forward.9} parent=5 // pred_fallthru
        _
      %p618 = scmp.le.s32.totalorder 2, %s17
      // Predicated region
      $region49: #{decoder_forward.9} parent=5 // pred_check
        %p619 = pneg %p618
      $region50: #{decoder_forward.9} parent=5 // pred_check_branch
        %621 = sbr.rel (%p619) target = $region52
      $region51: #{decoder_forward.9} parent=5 // pred_region
        %s622 = ssub.s32 %s17, 2
        // Predicated region
        $region53: #{decoder_forward.9} parent=51 // pred_check
          %p623 = pneg %p136
        $region54: #{decoder_forward.9} parent=51 // pred_check_branch
          %625 = sbr.rel (%p623) target = $region56
        $region55: #{decoder_forward.9} parent=51 // pred_region
          %s626 = sand.u32 %s121, 1
          %s627 = scalar_lea.sflag [#allocation5], %s626
          %s628 = sand.u32 %s121, 1
          %s629 = smul.addr %s628, 128
          %s630 = scalar_lea.vmem [#allocation8], %s629
          %631 = dma.done %s627, 2048
        $region56: #{decoder_forward.9} parent=51 // pred_fallthru
          _
      $region52: #{decoder_forward.9} parent=5 // pred_fallthru
        _
    $region6: #{decoder_forward.9} parent=1 // loop_footer
      %s21 = sadd.s32 1, %s17
    $region7: #{decoder_forward.9} parent=1 // loop_footer_branch
      %16 = sbr.rel target = $region3
    $region8: #{decoder_forward.9} parent=1 // loop_exit
      _
    %632 = vsyncpa [#allocation4], 1
    %s633 = scalar_lea.sflag [#allocation4], 1
    %634 = vsyncpa %s633, 1
    %635 = vsyncpa [#allocation7], 1
    %s636 = scalar_lea.sflag [#allocation7], 1
    %637 = vsyncpa %s636, 1
    %638 = vsyncpa [#allocation5], 1
    %s639 = scalar_lea.sflag [#allocation5], 1
    %640 = vsyncpa %s639, 1

</llo_original>
